<compile_context>
chip_gen: v5e
topology: v5e:2x2
jax: 0.10.0
libtpu: 0.0.40
codegen_flags: <defaults>
</compile_context>

<pallas_src>
import functools

import numpy as np
import jax
import jax.numpy as jnp
from jax import lax
from jax.experimental import pallas as pl
from jax.experimental.pallas import tpu as pltpu


def _round_up(x, m):
    return ((x + m - 1) // m) * m


def _vmem_limit_bytes():
    """Generation-aware VMEM limit: physical capacity minus 16 MiB headroom
    (v5e/v6e: 128 MiB -> 112 MiB, v7x: 64 MiB -> 48 MiB)."""
    cap = 64 * 1024 * 1024
    try:
        cap = int(getattr(pltpu.get_tpu_info(), "vmem_capacity_bytes", cap))
    except Exception:
        pass
    return int(max(cap - 16 * 1024 * 1024, 32 * 1024 * 1024))


_VMEM_LIMIT = _vmem_limit_bytes()


def _pick_row_tile(p, target=256, mult=16):
    """Largest row tile <= target that divides p (falls back to the full p).
    target=256 keeps kernel-2 blocks inside v7x's 64 MiB VMEM at large C."""
    if p <= target:
        return p
    for t in range(target, mult - 1, -mult):
        if p % t == 0:
            return t
    return p


def _pick_chunk_rows(rows, row_width, cb, target_elems=16384):
    """Largest divisor of `rows` such that a (chunk_rows*row_width, cb) f32
    accumulator stays around `target_elems` elements (bounds vreg live ranges
    so the 9-tap accumulation does not spill)."""
    limit = max(1, target_elems // max(1, row_width * cb))
    best = 1
    for d in range(1, rows + 1):
        if rows % d == 0 and d <= limit:
            best = d
    return best


# ----------------------------------------------------------------------------
# Kernel 1: conv_a (1x1) + BN + ReLU  ->  grouped 3x3 conv + BN + ReLU
#           -> SE global average pool (as per-sample channel sums)
# ----------------------------------------------------------------------------
def _a_gconv_pool_kernel(x_ref, wa_ref, as_ref, ab_ref, w9_ref, bs_ref, bb_ref,
                         h2_ref, pool_ref, halo_ref,
                         *, stride, h, w, ho, wo, tra, trb, pad_l):
    """Grid = (batch, channel_block).  One whole sample's spatial extent per
    step for one channel block; h1 lives only in the VMEM halo scratch whose
    interior starts at the sublane-aligned column `pad_l`."""
    cin = x_ref.shape[-1]
    cb = h2_ref.shape[-1]
    hdt = halo_ref.dtype
    wz = halo_ref.shape[1]

    # --- zero only the halo border (interior is fully overwritten below) ----
    halo_ref[:, 0:pad_l, :] = jnp.zeros((h + 2, pad_l, cb), hdt)
    halo_ref[:, pad_l + w:wz, :] = jnp.zeros((h + 2, wz - (pad_l + w), cb), hdt)
    halo_ref[0:1, pad_l:pad_l + w, :] = jnp.zeros((1, w, cb), hdt)
    halo_ref[h + 1:h + 2, pad_l:pad_l + w, :] = jnp.zeros((1, w, cb), hdt)

    # --- phase A: conv_a (1x1) + BN + ReLU -> halo interior (row-chunked) ---
    def conv_a_chunk(c, carry):
        r0 = c * tra
        xc = x_ref[0, pl.ds(r0, tra), :, :].reshape(tra * w, cin)
        h1 = jnp.dot(xc.astype(jnp.bfloat16), wa_ref[0],
                     preferred_element_type=jnp.float32)
        h1 = jnp.maximum(h1 * as_ref[0] + ab_ref[0], 0.0)
        halo_ref[pl.ds(1 + r0, tra), pad_l:pad_l + w, :] = (
            h1.reshape(tra, w, cb).astype(hdt))
        return carry

    lax.fori_loop(0, h // tra, conv_a_chunk, 0)

    # --- phase B: grouped 3x3 conv (9 shifted taps x diagonal weight block),
    #     BN + ReLU, h2 store, SE pool accumulation (row-chunked) ------------
    pool_ref[...] = jnp.zeros_like(pool_ref)

    def gconv_chunk(c, carry):
        r0 = c * trb
        acc = jnp.zeros((trb * wo, cb), jnp.float32)
        for ky in range(3):
            for kx in range(3):
                c0 = pad_l - 1 + kx
                if stride == 1:
                    tap = halo_ref[pl.ds(r0 + ky, trb), c0:c0 + wo, :]
                else:
                    tap = halo_ref[pl.ds(r0 * stride + ky, trb, stride),
                                   pl.ds(c0, wo, stride), :]
                acc = acc + jnp.dot(
                    tap.reshape(trb * wo, cb).astype(jnp.bfloat16),
                    w9_ref[0, ky * 3 + kx],
                    preferred_element_type=jnp.float32)
        y = jnp.maximum(acc * bs_ref[0] + bb_ref[0], 0.0)
        h2_ref[0, pl.ds(r0, trb), :, :] = (
            y.reshape(trb, wo, cb).astype(h2_ref.dtype))
        pool_ref[...] += jnp.sum(y, axis=0, keepdims=True).reshape(1, 1, cb)
        return carry

    lax.fori_loop(0, ho // trb, gconv_chunk, 0)


def fused_a_gconv_pool(x_nhwc, params, stride):
    n, h, w, cin = x_nhwc.shape
    nblk, _, cb = params["wa_blk"].shape
    CB = nblk * cb
    ho = (h - 1) // stride + 1
    wo = (w - 1) // stride + 1
    # bf16 halo for the common stride-1 case (half the VMEM / store traffic);
    # f32 halo for stride>1 so the sublane-strided tap reads stay on the
    # well-supported f32 path.  Interior starts at a sublane-aligned column.
    if stride == 1:
        halo_dtype, pad_l = jnp.bfloat16, 16
    else:
        halo_dtype, pad_l = jnp.float32, 8
    wz = _round_up(pad_l + w + 1, 8)
    tra = _pick_chunk_rows(h, w, cb)
    trb = _pick_chunk_rows(ho, wo, cb)
    kern = functools.partial(_a_gconv_pool_kernel, stride=stride, h=h, w=w,
                             ho=ho, wo=wo, tra=tra, trb=trb, pad_l=pad_l)
    # TODO(synk): on v7x, verify both TensorCores are used; if not, switch the
    # batch axis to pltpu.CORE_PARALLEL.
    return pl.pallas_call(
        kern,
        out_shape=(jax.ShapeDtypeStruct((n, ho, wo, CB), jnp.bfloat16),
                   jax.ShapeDtypeStruct((n, 1, CB), jnp.float32)),
        grid=(n, nblk),
        in_specs=[
            pl.BlockSpec((1, h, w, cin), lambda i, j: (i, 0, 0, 0)),
            pl.BlockSpec((1, cin, cb), lambda i, j: (j, 0, 0)),
            pl.BlockSpec((1, 1, cb), lambda i, j: (j, 0, 0)),
            pl.BlockSpec((1, 1, cb), lambda i, j: (j, 0, 0)),
            pl.BlockSpec((1, 9, cb, cb), lambda i, j: (j, 0, 0, 0)),
            pl.BlockSpec((1, 1, cb), lambda i, j: (j, 0, 0)),
            pl.BlockSpec((1, 1, cb), lambda i, j: (j, 0, 0)),
        ],
        out_specs=(
            pl.BlockSpec((1, ho, wo, cb), lambda i, j: (i, 0, 0, j)),
            pl.BlockSpec((1, 1, cb), lambda i, j: (i, 0, j)),
        ),
        scratch_shapes=[pltpu.VMEM((h + 2, wz, cb), halo_dtype)],
        compiler_params=pltpu.CompilerParams(
            dimension_semantics=("parallel", "parallel"),
            vmem_limit_bytes=_VMEM_LIMIT),
    )(x_nhwc, params["wa_blk"], params["a_scale"], params["a_bias"],
      params["w9_blk"], params["b_scale"], params["b_bias"])


# ----------------------------------------------------------------------------
# Kernel 2: SE gate * h2 (bf16) -> conv_c (1x1) + BN, fused skip (projected or
#           identity), residual add, final ReLU; bf16 output
# ----------------------------------------------------------------------------
def _c_proj_kernel(h2_ref, g_ref, wc_ref, cs_ref, cbi_ref,
                   xs_ref, wp_ref, ps_ref, pb_ref, o_ref):
    hg = h2_ref[0] * g_ref[0].astype(jnp.bfloat16)              # bf16 VPU
    y = jnp.dot(hg, wc_ref[...], preferred_element_type=jnp.float32)
    y = y * cs_ref[...] + cbi_ref[...]
    sk = jnp.dot(xs_ref[0].astype(jnp.bfloat16), wp_ref[...],
                 preferred_element_type=jnp.float32)
    sk = sk * ps_ref[...] + pb_ref[...]
    o_ref[...] = jnp.maximum(y + sk, 0.0).reshape(o_ref.shape).astype(o_ref.dtype)


def _c_ident_kernel(h2_ref, g_ref, wc_ref, cs_ref, cbi_ref, skip_ref, o_ref):
    hg = h2_ref[0] * g_ref[0].astype(jnp.bfloat16)              # bf16 VPU
    y = jnp.dot(hg, wc_ref[...], preferred_element_type=jnp.float32)
    y = y * cs_ref[...] + cbi_ref[...]
    y = y + skip_ref[0].astype(jnp.float32)
    o_ref[...] = jnp.maximum(y, 0.0).reshape(o_ref.shape).astype(o_ref.dtype)


def fused_c_residual(h2, gate, skip, params):
    n, hw, CB = h2.shape
    COUT = params["wc"].shape[1]
    thw = _pick_row_tile(hw)
    grid = (n, hw // thw)
    cparams = pltpu.CompilerParams(
        dimension_semantics=("parallel", "parallel"),
        vmem_limit_bytes=_VMEM_LIMIT)
    row = lambda i, j: (i, j, 0)
    gidx = lambda i, j: (i, 0, 0)
    rep2 = lambda i, j: (0, 0)
    # TODO(synk): pipeline_mode=pl.Buffered(1) on the constant-index weight /
    # scale specs would halve their VMEM cost on v7x.

    if params["proj_block"]:
        cin = skip.shape[-1]
        return pl.pallas_call(
            _c_proj_kernel,
            out_shape=jax.ShapeDtypeStruct((n, hw, COUT), jnp.bfloat16),
            grid=grid,
            in_specs=[
                pl.BlockSpec((1, thw, CB), row),
                pl.BlockSpec((1, 1, CB), gidx),
                pl.BlockSpec((CB, COUT), rep2),
                pl.BlockSpec((1, COUT), rep2),
                pl.BlockSpec((1, COUT), rep2),
                pl.BlockSpec((1, thw, cin), row),
                pl.BlockSpec((cin, COUT), rep2),
                pl.BlockSpec((1, COUT), rep2),
                pl.BlockSpec((1, COUT), rep2),
            ],
            out_specs=pl.BlockSpec((1, thw, COUT), row),
            compiler_params=cparams,
        )(h2, gate, params["wc"], params["c_scale"], params["c_bias"],
          skip, params["wproj"], params["p_scale"], params["p_bias"])
    else:
        return pl.pallas_call(
            _c_ident_kernel,
            out_shape=jax.ShapeDtypeStruct((n, hw, COUT), jnp.bfloat16),
            grid=grid,
            in_specs=[
                pl.BlockSpec((1, thw, CB), row),
                pl.BlockSpec((1, 1, CB), gidx),
                pl.BlockSpec((CB, COUT), rep2),
                pl.BlockSpec((1, COUT), rep2),
                pl.BlockSpec((1, COUT), rep2),
                pl.BlockSpec((1, thw, COUT), row),
            ],
            out_specs=pl.BlockSpec((1, thw, COUT), row),
            compiler_params=cparams,
        )(h2, gate, params["wc"], params["c_scale"], params["c_bias"], skip)


# ----------------------------------------------------------------------------
# Parameters (deterministic synthetic init, BN folded to scale/bias, channel
# dims padded to multiples of 128, MXU weights stored in bf16)
# ----------------------------------------------------------------------------
def _bn_scale_bias(key, c, eps=1e-5):
    k1, k2, k3, k4 = jax.random.split(key, 4)
    gamma = 1.0 + 0.1 * jax.random.normal(k1, (c,), jnp.float32)
    beta = 0.1 * jax.random.normal(k2, (c,), jnp.float32)
    mean = 0.1 * jax.random.normal(k3, (c,), jnp.float32)
    var = 0.5 + 0.5 * jnp.abs(jax.random.normal(k4, (c,), jnp.float32))
    scale = gamma / jnp.sqrt(var + eps)
    bias = beta - mean * scale
    return scale[None, :], bias[None, :]


def init_params(key, w_in, w_out, stride, bm, gw, se_r):
    w_b = int(round(w_out * bm))
    assert w_b % gw == 0, "RegNet requires gw | w_b"
    num_gs = w_b // gw
    cpg = w_b // num_gs                     # in/out channels per group (== gw)
    CB = _round_up(w_b, 128)                # padded bottleneck width
    COUT = _round_up(w_out, 128)            # padded output width
    CIN = _round_up(w_in, 128)              # padded input width
    # channel-block width for the grouped conv: 256 fills the v6e/v7x 256x256
    # MXU (K=N=256 per tap, N=256 for conv_a), 128 is native on v5e; fall back
    # to one dense block when group boundaries straddle the block boundary.
    if CB % 256 == 0 and 256 % cpg == 0:
        cb = 256
    elif 128 % cpg == 0:
        cb = 128
    else:
        cb = CB
    nblk = CB // cb

    ks = list(jax.random.split(key, 12))
    p = {"proj_block": (w_in != w_out) or (stride != 1),
         "w_out": w_out, "w_b": w_b, "cin_pad": CIN}

    # conv a: 1x1 (w_in -> w_b), folded BN
    wa = 0.1 * jax.random.normal(ks[0], (w_in, w_b), jnp.float32)
    wa = jnp.pad(wa, ((0, CIN - w_in), (0, CB - w_b)))
    p["wa_blk"] = wa.reshape(CIN, nblk, cb).transpose(1, 0, 2).astype(jnp.bfloat16)
    a_s, a_b = _bn_scale_bias(ks[1], w_b)
    p["a_scale"] = jnp.pad(a_s, ((0, 0), (0, CB - w_b))).reshape(nblk, 1, cb)
    p["a_bias"] = jnp.pad(a_b, ((0, 0), (0, CB - w_b))).reshape(nblk, 1, cb)

    # conv b: grouped 3x3 (PyTorch layout (out, in/groups, 3, 3)) expanded only
    # to the diagonal per-tap channel blocks (nblk, 9, cb, cb).
    wg = np.asarray(0.1 * jax.random.normal(ks[2], (w_b, cpg, 3, 3), jnp.float32))
    w9 = np.zeros((9, CB, CB), np.float32)
    for g in range(num_gs):
        for ky in range(3):
            for kx in range(3):
                blk = wg[g * cpg:(g + 1) * cpg, :, ky, kx]      # (out=cpg, in=cpg)
                w9[ky * 3 + kx,
                   g * cpg:(g + 1) * cpg,                        # input rows
                   g * cpg:(g + 1) * cpg] = blk.T                # output cols
    w9_blk = np.stack([w9[:, b * cb:(b + 1) * cb, b * cb:(b + 1) * cb]
                       for b in range(nblk)], axis=0)
    p["w9_blk"] = jnp.asarray(w9_blk).astype(jnp.bfloat16)
    b_s, b_b = _bn_scale_bias(ks[3], w_b)
    p["b_scale"] = jnp.pad(b_s, ((0, 0), (0, CB - w_b))).reshape(nblk, 1, cb)
    p["b_bias"] = jnp.pad(b_b, ((0, 0), (0, CB - w_b))).reshape(nblk, 1, cb)

    # SE (w_se = round(w_in * se_r), as in the reference module)
    if se_r:
        w_se = int(round(w_in * se_r))
        se_w1 = 0.1 * jax.random.normal(ks[4], (w_b, w_se), jnp.float32)
        p["se_w1"] = jnp.pad(se_w1, ((0, CB - w_b), (0, 0)))
        p["se_b1"] = 0.1 * jax.random.normal(ks[5], (w_se,), jnp.float32)
        se_w2 = 0.1 * jax.random.normal(ks[6], (w_se, w_b), jnp.float32)
        p["se_w2"] = jnp.pad(se_w2, ((0, 0), (0, CB - w_b)))
        se_b2 = 0.1 * jax.random.normal(ks[7], (w_b,), jnp.float32)
        p["se_b2"] = jnp.pad(se_b2, ((0, CB - w_b),))

    # conv c: 1x1 (w_b -> w_out), folded BN
    wc = 0.1 * jax.random.normal(ks[8], (w_b, w_out), jnp.float32)
    p["wc"] = jnp.pad(wc, ((0, CB - w_b), (0, COUT - w_out))).astype(jnp.bfloat16)
    c_s, c_b = _bn_scale_bias(ks[9], w_out)
    p["c_scale"] = jnp.pad(c_s, ((0, 0), (0, COUT - w_out)))
    p["c_bias"] = jnp.pad(c_b, ((0, 0), (0, COUT - w_out)))

    # projection skip: 1x1 stride-s conv + folded BN
    if p["proj_block"]:
        wp = 0.1 * jax.random.normal(ks[10], (w_in, w_out), jnp.float32)
        p["wproj"] = jnp.pad(wp, ((0, CIN - w_in), (0, COUT - w_out))).astype(jnp.bfloat16)
        p_s, p_b = _bn_scale_bias(ks[11], w_out)
        p["p_scale"] = jnp.pad(p_s, ((0, 0), (0, COUT - w_out)))
        p["p_bias"] = jnp.pad(p_b, ((0, 0), (0, COUT - w_out)))
    return p


# ----------------------------------------------------------------------------
# Forward pass (Pallas)
# ----------------------------------------------------------------------------
def res_bottleneck_block(x_nchw, params, stride, se_r):
    n, cin, h, w = x_nchw.shape
    cin_pad = params["cin_pad"]
    x = jnp.transpose(x_nchw, (0, 2, 3, 1))             # NCHW -> NHWC
    if cin_pad != cin:
        # one cheap lane-pad so conv_a / projection matmuls see K >= 128 and
        # all x / skip loads are lane-dense
        x = jnp.pad(x, ((0, 0), (0, 0), (0, 0), (0, cin_pad - cin)))
    ho = (h - 1) // stride + 1
    wo = (w - 1) // stride + 1

    # Kernel 1: conv_a + BN + ReLU -> grouped 3x3 + BN + ReLU -> SE pool sums
    h2, pool_sum = fused_a_gconv_pool(x, params, stride)
    CB = h2.shape[-1]

    # SE excitation: tiny (N, C) FCs in XLA -> per-sample channel gate
    if se_r:
        s = pool_sum[:, 0, :] * (1.0 / float(ho * wo))
        z = jnp.maximum(s @ params["se_w1"] + params["se_b1"], 0.0)
        gate = jax.nn.sigmoid(z @ params["se_w2"] + params["se_b2"])[:, None, :]
    else:
        gate = jnp.ones((n, 1, CB), jnp.float32)

    # Kernel 2: SE gate + conv_c + BN + (projected) skip + residual + ReLU
    h2f = h2.reshape(n, ho * wo, CB)
    COUT = params["wc"].shape[1]
    if params["proj_block"]:
        if stride != 1:
            # TODO(synk): for stride > 1 a small strided bf16 skip slab is
            # still materialized in XLA; could be emitted by kernel 1 instead.
            skip_src = x[:, ::stride, ::stride, :].astype(jnp.bfloat16)
            skip_src = skip_src.reshape(n, ho * wo, cin_pad)
        else:
            skip_src = x.reshape(n, ho * wo, cin_pad)
    else:
        # identity skip: the padded x already has COUT (== cin_pad) channels;
        # no extra tensor is materialized.
        skip_src = x.reshape(n, ho * wo, cin_pad)
    out = fused_c_residual(h2f, gate, skip_src, params)

    out = out.reshape(n, ho, wo, COUT)[..., :params["w_out"]]
    return jnp.transpose(out, (0, 3, 1, 2)).astype(jnp.float32)  # NHWC -> NCHW


# ----------------------------------------------------------------------------
# Pure-JAX reference (same folded-BN math and bf16 cast points, no Pallas)
# ----------------------------------------------------------------------------
def reference_forward(x_nchw, params, stride, se_r):
    n, cin, h, w = x_nchw.shape
    CIN = params["cin_pad"]
    x = jnp.transpose(x_nchw, (0, 2, 3, 1)).astype(jnp.float32)
    if CIN != cin:
        x = jnp.pad(x, ((0, 0), (0, 0), (0, 0), (0, CIN - cin)))
    nblk, _, cb = params["wa_blk"].shape
    CB = nblk * cb

    # conv a
    wa = jnp.transpose(params["wa_blk"], (1, 0, 2)).reshape(CIN, CB)
    a_s = params["a_scale"].reshape(1, CB)
    a_b = params["a_bias"].reshape(1, CB)
    h1 = jnp.dot(x.reshape(-1, CIN).astype(jnp.bfloat16), wa,
                 preferred_element_type=jnp.float32)
    h1 = jnp.maximum(h1 * a_s + a_b, 0.0).astype(jnp.bfloat16)
    h1 = h1.reshape(n, h, w, CB)

    # grouped 3x3 conv via dense block-diagonal per-tap matrices
    w9 = jnp.zeros((9, CB, CB), jnp.bfloat16)
    for b in range(nblk):
        w9 = w9.at[:, b * cb:(b + 1) * cb, b * cb:(b + 1) * cb].set(
            params["w9_blk"][b])
    b_s = params["b_scale"].reshape(1, CB)
    b_b = params["b_bias"].reshape(1, CB)
    ho = (h - 1) // stride + 1
    wo = (w - 1) // stride + 1
    hp = jnp.pad(h1, ((0, 0), (1, 1), (1, 1), (0, 0)))
    acc = jnp.zeros((n * ho * wo, CB), jnp.float32)
    for ky in range(3):
        for kx in range(3):
            tap = hp[:, ky:ky + (ho - 1) * stride + 1:stride,
                        kx:kx + (wo - 1) * stride + 1:stride, :]
            acc = acc + jnp.dot(tap.reshape(-1, CB), w9[ky * 3 + kx],
                                preferred_element_type=jnp.float32)
    h2 = jnp.maximum(acc * b_s + b_b, 0.0)                       # f32

    # SE
    if se_r:
        s = h2.reshape(n, ho * wo, CB).mean(axis=1)
        z = jnp.maximum(s @ params["se_w1"] + params["se_b1"], 0.0)
        g = jax.nn.sigmoid(z @ params["se_w2"] + params["se_b2"])
    else:
        g = jnp.ones((n, CB), jnp.float32)

    # conv c + BN + skip + ReLU (h2 crosses HBM as bf16, gate multiply in bf16)
    hg = (h2.astype(jnp.bfloat16).reshape(n, ho * wo, CB)
          * g.astype(jnp.bfloat16)[:, None, :])
    y = jnp.dot(hg.reshape(-1, CB), params["wc"],
                preferred_element_type=jnp.float32)
    y = y * params["c_scale"] + params["c_bias"]
    COUT = params["wc"].shape[1]
    if params["proj_block"]:
        xs = x[:, ::stride, ::stride, :].reshape(-1, CIN).astype(jnp.bfloat16)
        sk = jnp.dot(xs, params["wproj"], preferred_element_type=jnp.float32)
        sk = sk * params["p_scale"] + params["p_bias"]
    else:
        sk = x.reshape(-1, CIN)              # CIN == COUT (zero-padded lanes)
    out = jnp.maximum(y + sk, 0.0).astype(jnp.bfloat16)          # bf16 output
    out = out.reshape(n, ho, wo, COUT)[..., :params["w_out"]]
    return jnp.transpose(out, (0, 3, 1, 2)).astype(jnp.float32)


if __name__ == "__main__":
    key = jax.random.PRNGKey(0)
    k1, k2, k3, k4 = jax.random.split(key, 4)

    # Config 1 (canonical RegNet case): w_in != w_out, stride 2 -> projection
    # skip, SE enabled, grouped 3x3 with group width 8.
    w_in, w_out, stride, bm, gw, se_r = 32, 64, 2, 1.0, 8, 0.25
    x1 = jax.random.normal(k1, (2, w_in, 16, 16), jnp.float32)   # NCHW like PyTorch
    p1 = init_params(k2, w_in, w_out, stride, bm, gw, se_r)
    out1 = jax.block_until_ready(res_bottleneck_block(x1, p1, stride, se_r))
    assert out1.shape == (2, w_out, 8, 8)
    ref1 = reference_forward(x1, p1, stride, se_r)
    np.testing.assert_allclose(np.asarray(out1), np.asarray(ref1),
                               rtol=1e-2, atol=1e-2)

    # Config 2: identity skip (w_in == w_out, stride 1), no SE.
    w_in, w_out, stride, bm, gw, se_r = 64, 64, 1, 1.0, 8, None
    x2 = jax.random.normal(k3, (2, w_in, 16, 16), jnp.float32)
    p2 = init_params(k4, w_in, w_out, stride, bm, gw, se_r)
    out2 = jax.block_until_ready(res_bottleneck_block(x2, p2, stride, se_r))
    assert out2.shape == (2, w_out, 16, 16)
    ref2 = reference_forward(x2, p2, stride, se_r)
    np.testing.assert_allclose(np.asarray(out2), np.asarray(ref2),
                               rtol=1e-2, atol=1e-2)

    print("KERNEL_OK")
</pallas_src>

<mosaic_0001>
module attributes {stable_mosaic.version = 11 : i64} {
  func.func @_a_gconv_pool_kernel(%arg0: i32, %arg1: i32, %arg2: memref<1x16x16x128xf32, #tpu.memory_space<vmem>>, %arg3: memref<1x128x128xbf16, #tpu.memory_space<vmem>>, %arg4: memref<1x1x128xf32, #tpu.memory_space<vmem>>, %arg5: memref<1x1x128xf32, #tpu.memory_space<vmem>>, %arg6: memref<1x9x128x128xbf16, #tpu.memory_space<vmem>>, %arg7: memref<1x1x128xf32, #tpu.memory_space<vmem>>, %arg8: memref<1x1x128xf32, #tpu.memory_space<vmem>>, %arg9: memref<1x8x8x128xbf16, #tpu.memory_space<vmem>>, %arg10: memref<1x1x128xf32, #tpu.memory_space<vmem>>, %arg11: memref<18x32x128xf32, #tpu.memory_space<vmem>>) attributes {dimension_semantics = [#tpu.dimension_semantics<parallel>, #tpu.dimension_semantics<parallel>], iteration_bounds = array<i64: 2, 1>, scalar_prefetch = 0 : i64, scratch_operands = 1 : i64, tpu.core_type = #tpu.core_type<tc>, window_params = [{transform_indices = @transform_0, window_bounds = array<i64: 1, 16, 16, 128>}, {transform_indices = @transform_1, window_bounds = array<i64: 1, 128, 128>}, {transform_indices = @transform_2, window_bounds = array<i64: 1, 1, 128>}, {transform_indices = @transform_3, window_bounds = array<i64: 1, 1, 128>}, {transform_indices = @transform_4, window_bounds = array<i64: 1, 9, 128, 128>}, {transform_indices = @transform_5, window_bounds = array<i64: 1, 1, 128>}, {transform_indices = @transform_6, window_bounds = array<i64: 1, 1, 128>}, {transform_indices = @transform_7, window_bounds = array<i64: 1, 8, 8, 128>}, {transform_indices = @transform_8, window_bounds = array<i64: 1, 1, 128>}]} {
    %cst = arith.constant 0.000000e+00 : f32
    %0 = vector.broadcast %cst : f32 to vector<18x8x128xf32>
    %c0 = arith.constant 0 : index
    %c0_0 = arith.constant 0 : index
    %c0_1 = arith.constant 0 : index
    %1 = vector.load %arg11[%c0, %c0_0, %c0_1] : memref<18x32x128xf32, #tpu.memory_space<vmem>>, vector<18x8x128xf32>
    tpu.vector_store %arg11[%c0, %c0_0, %c0_1], %0 {strides = array<i32>} : memref<18x32x128xf32, #tpu.memory_space<vmem>>, vector<18x8x128xf32>,
    %cst_2 = arith.constant 0.000000e+00 : f32
    %2 = vector.broadcast %cst_2 : f32 to vector<18x8x128xf32>
    %c0_3 = arith.constant 0 : index
    %c24 = arith.constant 24 : index
    %c0_4 = arith.constant 0 : index
    %3 = vector.load %arg11[%c0_3, %c24, %c0_4] : memref<18x32x128xf32, #tpu.memory_space<vmem>>, vector<18x8x128xf32>
    tpu.vector_store %arg11[%c0_3, %c24, %c0_4], %2 {strides = array<i32>} : memref<18x32x128xf32, #tpu.memory_space<vmem>>, vector<18x8x128xf32>,
    %cst_5 = arith.constant 0.000000e+00 : f32
    %4 = vector.broadcast %cst_5 : f32 to vector<1x16x128xf32>
    %c0_6 = arith.constant 0 : index
    %c8 = arith.constant 8 : index
    %c0_7 = arith.constant 0 : index
    %5 = vector.load %arg11[%c0_6, %c8, %c0_7] : memref<18x32x128xf32, #tpu.memory_space<vmem>>, vector<1x16x128xf32>
    tpu.vector_store %arg11[%c0_6, %c8, %c0_7], %4 {strides = array<i32>} : memref<18x32x128xf32, #tpu.memory_space<vmem>>, vector<1x16x128xf32>,
    %cst_8 = arith.constant 0.000000e+00 : f32
    %6 = vector.broadcast %cst_8 : f32 to vector<1x16x128xf32>
    %c17 = arith.constant 17 : index
    %c8_9 = arith.constant 8 : index
    %c0_10 = arith.constant 0 : index
    %7 = vector.load %arg11[%c17, %c8_9, %c0_10] : memref<18x32x128xf32, #tpu.memory_space<vmem>>, vector<1x16x128xf32>
    tpu.vector_store %arg11[%c17, %c8_9, %c0_10], %6 {strides = array<i32>} : memref<18x32x128xf32, #tpu.memory_space<vmem>>, vector<1x16x128xf32>,
    %c0_i32 = arith.constant 0 : i32
    %c2_i32 = arith.constant 2 : i32
    %8 = arith.addi %c0_i32, %c2_i32 : i32
    %c1_i32 = arith.constant 1 : i32
    scf.for %arg12 = %c0_i32 to %8 step %c1_i32  : i32 {
      %c8_i32_109 = arith.constant 8 : i32
      %125 = arith.muli %arg12, %c8_i32_109 : i32
      %c0_110 = arith.constant 0 : index
      %126 = arith.index_cast %125 : i32 to index
      %c0_111 = arith.constant 0 : index
      %c0_112 = arith.constant 0 : index
      %127 = vector.load %arg2[%c0_110, %126, %c0_111, %c0_112] : memref<1x16x16x128xf32, #tpu.memory_space<vmem>>, vector<1x8x16x128xf32>
      %128 = vector.shape_cast %127 : vector<1x8x16x128xf32> to vector<8x16x128xf32>
      %129 = vector.shape_cast %128 : vector<8x16x128xf32> to vector<128x128xf32>
      %130 = arith.truncf %129 : vector<128x128xf32> to vector<128x128xbf16>
      %c0_113 = arith.constant 0 : index
      %c0_114 = arith.constant 0 : index
      %c0_115 = arith.constant 0 : index
      %131 = vector.load %arg3[%c0_113, %c0_114, %c0_115] : memref<1x128x128xbf16, #tpu.memory_space<vmem>>, vector<1x128x128xbf16>
      %132 = vector.shape_cast %131 : vector<1x128x128xbf16> to vector<128x128xbf16>
      %cst_116 = arith.constant dense<0.000000e+00> : vector<128x128xf32>
      %133 = tpu.matmul %130, %132, %cst_116 {dimension_numbers = #tpu.dot_dimension_numbers<[1], [0], [0], [1], [0, 0, 1, 1], [], []>} : vector<128x128xbf16>, vector<128x128xbf16>, vector<128x128xf32> -> vector<128x128xf32>
      %c0_117 = arith.constant 0 : index
      %c0_118 = arith.constant 0 : index
      %c0_119 = arith.constant 0 : index
      %134 = vector.load %arg4[%c0_117, %c0_118, %c0_119] : memref<1x1x128xf32, #tpu.memory_space<vmem>>, vector<1x1x128xf32>
      %135 = vector.shape_cast %134 : vector<1x1x128xf32> to vector<1x128xf32>
      %136 = vector.broadcast %135 : vector<1x128xf32> to vector<128x128xf32>
      %137 = arith.mulf %133, %136 : vector<128x128xf32>
      %c0_120 = arith.constant 0 : index
      %c0_121 = arith.constant 0 : index
      %c0_122 = arith.constant 0 : index
      %138 = vector.load %arg5[%c0_120, %c0_121, %c0_122] : memref<1x1x128xf32, #tpu.memory_space<vmem>>, vector<1x1x128xf32>
      %139 = vector.shape_cast %138 : vector<1x1x128xf32> to vector<1x128xf32>
      %140 = vector.broadcast %139 : vector<1x128xf32> to vector<128x128xf32>
      %141 = arith.addf %137, %140 : vector<128x128xf32>
      %cst_123 = arith.constant 0.000000e+00 : f32
      %142 = vector.broadcast %cst_123 : f32 to vector<128x128xf32>
      %143 = arith.maximumf %141, %142 : vector<128x128xf32>
      %144 = vector.shape_cast %143 : vector<128x128xf32> to vector<8x16x128xf32>
      %c1_i32_124 = arith.constant 1 : i32
      %145 = arith.addi %c1_i32_124, %125 : i32
      %146 = arith.index_cast %145 : i32 to index
      %c8_125 = arith.constant 8 : index
      %c0_126 = arith.constant 0 : index
      %147 = vector.load %arg11[%146, %c8_125, %c0_126] : memref<18x32x128xf32, #tpu.memory_space<vmem>>, vector<8x16x128xf32>
      tpu.vector_store %arg11[%146, %c8_125, %c0_126], %144 {strides = array<i32>} : memref<18x32x128xf32, #tpu.memory_space<vmem>>, vector<8x16x128xf32>,
    }
    %c2_i32_11 = arith.constant 2 : i32
    %cst_12 = arith.constant 0.000000e+00 : f32
    %9 = vector.broadcast %cst_12 : f32 to vector<1x1x128xf32>
    %c0_13 = arith.constant 0 : index
    %c0_14 = arith.constant 0 : index
    %c0_15 = arith.constant 0 : index
    %10 = vector.load %arg10[%c0_13, %c0_14, %c0_15] : memref<1x1x128xf32, #tpu.memory_space<vmem>>, vector<1x1x128xf32>
    tpu.vector_store %arg10[%c0_13, %c0_14, %c0_15], %9 {strides = array<i32>} : memref<1x1x128xf32, #tpu.memory_space<vmem>>, vector<1x1x128xf32>,
    %c0_i32_16 = arith.constant 0 : i32
    %c8_i32 = arith.constant 8 : i32
    %11 = arith.muli %c0_i32_16, %c8_i32 : i32
    %cst_17 = arith.constant 0.000000e+00 : f32
    %12 = vector.broadcast %cst_17 : f32 to vector<64x128xf32>
    %c2_i32_18 = arith.constant 2 : i32
    %13 = arith.muli %11, %c2_i32_18 : i32
    %c0_i32_19 = arith.constant 0 : i32
    %14 = arith.addi %13, %c0_i32_19 : i32
    %15 = arith.index_cast %14 : i32 to index
    %c7 = arith.constant 7 : index
    %c0_20 = arith.constant 0 : index
    %16 = tpu.strided_load %arg11[%15, %c7, %c0_20] {strides = array<i32: 2, 2, 1>} : memref<18x32x128xf32, #tpu.memory_space<vmem>>, vector<8x8x128xf32>
    %17 = vector.shape_cast %16 : vector<8x8x128xf32> to vector<64x128xf32>
    %18 = arith.truncf %17 : vector<64x128xf32> to vector<64x128xbf16>
    %c0_21 = arith.constant 0 : index
    %c0_22 = arith.constant 0 : index
    %c0_23 = arith.constant 0 : index
    %c0_24 = arith.constant 0 : index
    %19 = vector.load %arg6[%c0_21, %c0_22, %c0_23, %c0_24] : memref<1x9x128x128xbf16, #tpu.memory_space<vmem>>, vector<1x1x128x128xbf16>
    %20 = vector.shape_cast %19 : vector<1x1x128x128xbf16> to vector<128x128xbf16>
    %cst_25 = arith.constant dense<0.000000e+00> : vector<64x128xf32>
    %21 = tpu.matmul %18, %20, %cst_25 {dimension_numbers = #tpu.dot_dimension_numbers<[1], [0], [0], [1], [0, 0, 1, 1], [], []>} : vector<64x128xbf16>, vector<128x128xbf16>, vector<64x128xf32> -> vector<64x128xf32>
    %22 = arith.addf %12, %21 : vector<64x128xf32>
    %c2_i32_26 = arith.constant 2 : i32
    %23 = arith.muli %11, %c2_i32_26 : i32
    %c0_i32_27 = arith.constant 0 : i32
    %24 = arith.addi %23, %c0_i32_27 : i32
    %25 = arith.index_cast %24 : i32 to index
    %c8_28 = arith.constant 8 : index
    %c0_29 = arith.constant 0 : index
    %26 = tpu.strided_load %arg11[%25, %c8_28, %c0_29] {strides = array<i32: 2, 2, 1>} : memref<18x32x128xf32, #tpu.memory_space<vmem>>, vector<8x8x128xf32>
    %27 = vector.shape_cast %26 : vector<8x8x128xf32> to vector<64x128xf32>
    %28 = arith.truncf %27 : vector<64x128xf32> to vector<64x128xbf16>
    %c0_30 = arith.constant 0 : index
    %c1 = arith.constant 1 : index
    %c0_31 = arith.constant 0 : index
    %c0_32 = arith.constant 0 : index
    %29 = vector.load %arg6[%c0_30, %c1, %c0_31, %c0_32] : memref<1x9x128x128xbf16, #tpu.memory_space<vmem>>, vector<1x1x128x128xbf16>
    %30 = vector.shape_cast %29 : vector<1x1x128x128xbf16> to vector<128x128xbf16>
    %cst_33 = arith.constant dense<0.000000e+00> : vector<64x128xf32>
    %31 = tpu.matmul %28, %30, %cst_33 {dimension_numbers = #tpu.dot_dimension_numbers<[1], [0], [0], [1], [0, 0, 1, 1], [], []>} : vector<64x128xbf16>, vector<128x128xbf16>, vector<64x128xf32> -> vector<64x128xf32>
    %32 = arith.addf %22, %31 : vector<64x128xf32>
    %c2_i32_34 = arith.constant 2 : i32
    %33 = arith.muli %11, %c2_i32_34 : i32
    %c0_i32_35 = arith.constant 0 : i32
    %34 = arith.addi %33, %c0_i32_35 : i32
    %35 = arith.index_cast %34 : i32 to index
    %c9 = arith.constant 9 : index
    %c0_36 = arith.constant 0 : index
    %36 = tpu.strided_load %arg11[%35, %c9, %c0_36] {strides = array<i32: 2, 2, 1>} : memref<18x32x128xf32, #tpu.memory_space<vmem>>, vector<8x8x128xf32>
    %37 = vector.shape_cast %36 : vector<8x8x128xf32> to vector<64x128xf32>
    %38 = arith.truncf %37 : vector<64x128xf32> to vector<64x128xbf16>
    %c0_37 = arith.constant 0 : index
    %c2 = arith.constant 2 : index
    %c0_38 = arith.constant 0 : index
    %c0_39 = arith.constant 0 : index
    %39 = vector.load %arg6[%c0_37, %c2, %c0_38, %c0_39] : memref<1x9x128x128xbf16, #tpu.memory_space<vmem>>, vector<1x1x128x128xbf16>
    %40 = vector.shape_cast %39 : vector<1x1x128x128xbf16> to vector<128x128xbf16>
    %cst_40 = arith.constant dense<0.000000e+00> : vector<64x128xf32>
    %41 = tpu.matmul %38, %40, %cst_40 {dimension_numbers = #tpu.dot_dimension_numbers<[1], [0], [0], [1], [0, 0, 1, 1], [], []>} : vector<64x128xbf16>, vector<128x128xbf16>, vector<64x128xf32> -> vector<64x128xf32>
    %42 = arith.addf %32, %41 : vector<64x128xf32>
    %c2_i32_41 = arith.constant 2 : i32
    %43 = arith.muli %11, %c2_i32_41 : i32
    %c1_i32_42 = arith.constant 1 : i32
    %44 = arith.addi %43, %c1_i32_42 : i32
    %45 = arith.index_cast %44 : i32 to index
    %c7_43 = arith.constant 7 : index
    %c0_44 = arith.constant 0 : index
    %46 = tpu.strided_load %arg11[%45, %c7_43, %c0_44] {strides = array<i32: 2, 2, 1>} : memref<18x32x128xf32, #tpu.memory_space<vmem>>, vector<8x8x128xf32>
    %47 = vector.shape_cast %46 : vector<8x8x128xf32> to vector<64x128xf32>
    %48 = arith.truncf %47 : vector<64x128xf32> to vector<64x128xbf16>
    %c0_45 = arith.constant 0 : index
    %c3 = arith.constant 3 : index
    %c0_46 = arith.constant 0 : index
    %c0_47 = arith.constant 0 : index
    %49 = vector.load %arg6[%c0_45, %c3, %c0_46, %c0_47] : memref<1x9x128x128xbf16, #tpu.memory_space<vmem>>, vector<1x1x128x128xbf16>
    %50 = vector.shape_cast %49 : vector<1x1x128x128xbf16> to vector<128x128xbf16>
    %cst_48 = arith.constant dense<0.000000e+00> : vector<64x128xf32>
    %51 = tpu.matmul %48, %50, %cst_48 {dimension_numbers = #tpu.dot_dimension_numbers<[1], [0], [0], [1], [0, 0, 1, 1], [], []>} : vector<64x128xbf16>, vector<128x128xbf16>, vector<64x128xf32> -> vector<64x128xf32>
    %52 = arith.addf %42, %51 : vector<64x128xf32>
    %c2_i32_49 = arith.constant 2 : i32
    %53 = arith.muli %11, %c2_i32_49 : i32
    %c1_i32_50 = arith.constant 1 : i32
    %54 = arith.addi %53, %c1_i32_50 : i32
    %55 = arith.index_cast %54 : i32 to index
    %c8_51 = arith.constant 8 : index
    %c0_52 = arith.constant 0 : index
    %56 = tpu.strided_load %arg11[%55, %c8_51, %c0_52] {strides = array<i32: 2, 2, 1>} : memref<18x32x128xf32, #tpu.memory_space<vmem>>, vector<8x8x128xf32>
    %57 = vector.shape_cast %56 : vector<8x8x128xf32> to vector<64x128xf32>
    %58 = arith.truncf %57 : vector<64x128xf32> to vector<64x128xbf16>
    %c0_53 = arith.constant 0 : index
    %c4 = arith.constant 4 : index
    %c0_54 = arith.constant 0 : index
    %c0_55 = arith.constant 0 : index
    %59 = vector.load %arg6[%c0_53, %c4, %c0_54, %c0_55] : memref<1x9x128x128xbf16, #tpu.memory_space<vmem>>, vector<1x1x128x128xbf16>
    %60 = vector.shape_cast %59 : vector<1x1x128x128xbf16> to vector<128x128xbf16>
    %cst_56 = arith.constant dense<0.000000e+00> : vector<64x128xf32>
    %61 = tpu.matmul %58, %60, %cst_56 {dimension_numbers = #tpu.dot_dimension_numbers<[1], [0], [0], [1], [0, 0, 1, 1], [], []>} : vector<64x128xbf16>, vector<128x128xbf16>, vector<64x128xf32> -> vector<64x128xf32>
    %62 = arith.addf %52, %61 : vector<64x128xf32>
    %c2_i32_57 = arith.constant 2 : i32
    %63 = arith.muli %11, %c2_i32_57 : i32
    %c1_i32_58 = arith.constant 1 : i32
    %64 = arith.addi %63, %c1_i32_58 : i32
    %65 = arith.index_cast %64 : i32 to index
    %c9_59 = arith.constant 9 : index
    %c0_60 = arith.constant 0 : index
    %66 = tpu.strided_load %arg11[%65, %c9_59, %c0_60] {strides = array<i32: 2, 2, 1>} : memref<18x32x128xf32, #tpu.memory_space<vmem>>, vector<8x8x128xf32>
    %67 = vector.shape_cast %66 : vector<8x8x128xf32> to vector<64x128xf32>
    %68 = arith.truncf %67 : vector<64x128xf32> to vector<64x128xbf16>
    %c0_61 = arith.constant 0 : index
    %c5 = arith.constant 5 : index
    %c0_62 = arith.constant 0 : index
    %c0_63 = arith.constant 0 : index
    %69 = vector.load %arg6[%c0_61, %c5, %c0_62, %c0_63] : memref<1x9x128x128xbf16, #tpu.memory_space<vmem>>, vector<1x1x128x128xbf16>
    %70 = vector.shape_cast %69 : vector<1x1x128x128xbf16> to vector<128x128xbf16>
    %cst_64 = arith.constant dense<0.000000e+00> : vector<64x128xf32>
    %71 = tpu.matmul %68, %70, %cst_64 {dimension_numbers = #tpu.dot_dimension_numbers<[1], [0], [0], [1], [0, 0, 1, 1], [], []>} : vector<64x128xbf16>, vector<128x128xbf16>, vector<64x128xf32> -> vector<64x128xf32>
    %72 = arith.addf %62, %71 : vector<64x128xf32>
    %c2_i32_65 = arith.constant 2 : i32
    %73 = arith.muli %11, %c2_i32_65 : i32
    %c2_i32_66 = arith.constant 2 : i32
    %74 = arith.addi %73, %c2_i32_66 : i32
    %75 = arith.index_cast %74 : i32 to index
    %c7_67 = arith.constant 7 : index
    %c0_68 = arith.constant 0 : index
    %76 = tpu.strided_load %arg11[%75, %c7_67, %c0_68] {strides = array<i32: 2, 2, 1>} : memref<18x32x128xf32, #tpu.memory_space<vmem>>, vector<8x8x128xf32>
    %77 = vector.shape_cast %76 : vector<8x8x128xf32> to vector<64x128xf32>
    %78 = arith.truncf %77 : vector<64x128xf32> to vector<64x128xbf16>
    %c0_69 = arith.constant 0 : index
    %c6 = arith.constant 6 : index
    %c0_70 = arith.constant 0 : index
    %c0_71 = arith.constant 0 : index
    %79 = vector.load %arg6[%c0_69, %c6, %c0_70, %c0_71] : memref<1x9x128x128xbf16, #tpu.memory_space<vmem>>, vector<1x1x128x128xbf16>
    %80 = vector.shape_cast %79 : vector<1x1x128x128xbf16> to vector<128x128xbf16>
    %cst_72 = arith.constant dense<0.000000e+00> : vector<64x128xf32>
    %81 = tpu.matmul %78, %80, %cst_72 {dimension_numbers = #tpu.dot_dimension_numbers<[1], [0], [0], [1], [0, 0, 1, 1], [], []>} : vector<64x128xbf16>, vector<128x128xbf16>, vector<64x128xf32> -> vector<64x128xf32>
    %82 = arith.addf %72, %81 : vector<64x128xf32>
    %c2_i32_73 = arith.constant 2 : i32
    %83 = arith.muli %11, %c2_i32_73 : i32
    %c2_i32_74 = arith.constant 2 : i32
    %84 = arith.addi %83, %c2_i32_74 : i32
    %85 = arith.index_cast %84 : i32 to index
    %c8_75 = arith.constant 8 : index
    %c0_76 = arith.constant 0 : index
    %86 = tpu.strided_load %arg11[%85, %c8_75, %c0_76] {strides = array<i32: 2, 2, 1>} : memref<18x32x128xf32, #tpu.memory_space<vmem>>, vector<8x8x128xf32>
    %87 = vector.shape_cast %86 : vector<8x8x128xf32> to vector<64x128xf32>
    %88 = arith.truncf %87 : vector<64x128xf32> to vector<64x128xbf16>
    %c0_77 = arith.constant 0 : index
    %c7_78 = arith.constant 7 : index
    %c0_79 = arith.constant 0 : index
    %c0_80 = arith.constant 0 : index
    %89 = vector.load %arg6[%c0_77, %c7_78, %c0_79, %c0_80] : memref<1x9x128x128xbf16, #tpu.memory_space<vmem>>, vector<1x1x128x128xbf16>
    %90 = vector.shape_cast %89 : vector<1x1x128x128xbf16> to vector<128x128xbf16>
    %cst_81 = arith.constant dense<0.000000e+00> : vector<64x128xf32>
    %91 = tpu.matmul %88, %90, %cst_81 {dimension_numbers = #tpu.dot_dimension_numbers<[1], [0], [0], [1], [0, 0, 1, 1], [], []>} : vector<64x128xbf16>, vector<128x128xbf16>, vector<64x128xf32> -> vector<64x128xf32>
    %92 = arith.addf %82, %91 : vector<64x128xf32>
    %c2_i32_82 = arith.constant 2 : i32
    %93 = arith.muli %11, %c2_i32_82 : i32
    %c2_i32_83 = arith.constant 2 : i32
    %94 = arith.addi %93, %c2_i32_83 : i32
    %95 = arith.index_cast %94 : i32 to index
    %c9_84 = arith.constant 9 : index
    %c0_85 = arith.constant 0 : index
    %96 = tpu.strided_load %arg11[%95, %c9_84, %c0_85] {strides = array<i32: 2, 2, 1>} : memref<18x32x128xf32, #tpu.memory_space<vmem>>, vector<8x8x128xf32>
    %97 = vector.shape_cast %96 : vector<8x8x128xf32> to vector<64x128xf32>
    %98 = arith.truncf %97 : vector<64x128xf32> to vector<64x128xbf16>
    %c0_86 = arith.constant 0 : index
    %c8_87 = arith.constant 8 : index
    %c0_88 = arith.constant 0 : index
    %c0_89 = arith.constant 0 : index
    %99 = vector.load %arg6[%c0_86, %c8_87, %c0_88, %c0_89] : memref<1x9x128x128xbf16, #tpu.memory_space<vmem>>, vector<1x1x128x128xbf16>
    %100 = vector.shape_cast %99 : vector<1x1x128x128xbf16> to vector<128x128xbf16>
    %cst_90 = arith.constant dense<0.000000e+00> : vector<64x128xf32>
    %101 = tpu.matmul %98, %100, %cst_90 {dimension_numbers = #tpu.dot_dimension_numbers<[1], [0], [0], [1], [0, 0, 1, 1], [], []>} : vector<64x128xbf16>, vector<128x128xbf16>, vector<64x128xf32> -> vector<64x128xf32>
    %102 = arith.addf %92, %101 : vector<64x128xf32>
    %c0_91 = arith.constant 0 : index
    %c0_92 = arith.constant 0 : index
    %c0_93 = arith.constant 0 : index
    %103 = vector.load %arg7[%c0_91, %c0_92, %c0_93] : memref<1x1x128xf32, #tpu.memory_space<vmem>>, vector<1x1x128xf32>
    %104 = vector.shape_cast %103 : vector<1x1x128xf32> to vector<1x128xf32>
    %105 = vector.broadcast %104 : vector<1x128xf32> to vector<64x128xf32>
    %106 = arith.mulf %102, %105 : vector<64x128xf32>
    %c0_94 = arith.constant 0 : index
    %c0_95 = arith.constant 0 : index
    %c0_96 = arith.constant 0 : index
    %107 = vector.load %arg8[%c0_94, %c0_95, %c0_96] : memref<1x1x128xf32, #tpu.memory_space<vmem>>, vector<1x1x128xf32>
    %108 = vector.shape_cast %107 : vector<1x1x128xf32> to vector<1x128xf32>
    %109 = vector.broadcast %108 : vector<1x128xf32> to vector<64x128xf32>
    %110 = arith.addf %106, %109 : vector<64x128xf32>
    %cst_97 = arith.constant 0.000000e+00 : f32
    %111 = vector.broadcast %cst_97 : f32 to vector<64x128xf32>
    %112 = arith.maximumf %110, %111 : vector<64x128xf32>
    %113 = vector.shape_cast %112 : vector<64x128xf32> to vector<8x8x128xf32>
    %114 = arith.truncf %113 : vector<8x8x128xf32> to vector<8x8x128xbf16>
    %c0_98 = arith.constant 0 : index
    %115 = arith.index_cast %11 : i32 to index
    %c0_99 = arith.constant 0 : index
    %c0_100 = arith.constant 0 : index
    %116 = vector.load %arg9[%c0_98, %115, %c0_99, %c0_100] : memref<1x8x8x128xbf16, #tpu.memory_space<vmem>>, vector<1x8x8x128xbf16>
    %117 = vector.shape_cast %116 : vector<1x8x8x128xbf16> to vector<8x8x128xbf16>
    %118 = vector.shape_cast %114 : vector<8x8x128xbf16> to vector<1x8x8x128xbf16>
    tpu.vector_store %arg9[%c0_98, %115, %c0_99, %c0_100], %118 {strides = array<i32>} : memref<1x8x8x128xbf16, #tpu.memory_space<vmem>>, vector<1x8x8x128xbf16>,
    %c0_101 = arith.constant 0 : index
    %c0_102 = arith.constant 0 : index
    %c0_103 = arith.constant 0 : index
    %119 = vector.load %arg10[%c0_101, %c0_102, %c0_103] : memref<1x1x128xf32, #tpu.memory_space<vmem>>, vector<1x1x128xf32>
    %cst_104 = arith.constant dense<0.000000e+00> : vector<128xf32>
    %120 = vector.multi_reduction <add>, %112, %cst_104 [0] : vector<64x128xf32> to vector<128xf32>
    %121 = vector.shape_cast %120 : vector<128xf32> to vector<1x128xf32>
    %122 = vector.shape_cast %121 : vector<1x128xf32> to vector<1x1x128xf32>
    %123 = arith.addf %119, %122 : vector<1x1x128xf32>
    %c0_105 = arith.constant 0 : index
    %c0_106 = arith.constant 0 : index
    %c0_107 = arith.constant 0 : index
    %124 = vector.load %arg10[%c0_105, %c0_106, %c0_107] : memref<1x1x128xf32, #tpu.memory_space<vmem>>, vector<1x1x128xf32>
    tpu.vector_store %arg10[%c0_105, %c0_106, %c0_107], %123 {strides = array<i32>} : memref<1x1x128xf32, #tpu.memory_space<vmem>>, vector<1x1x128xf32>,
    %c1_i32_108 = arith.constant 1 : i32
    return
  }
  func.func @transform_0(%arg0: i32, %arg1: i32) -> (i32, i32, i32, i32) {
    %c0_i32 = arith.constant 0 : i32
    %c0_i32_0 = arith.constant 0 : i32
    %c0_i32_1 = arith.constant 0 : i32
    %c0_i32_2 = arith.constant 0 : i32
    return %arg0, %c0_i32, %c0_i32_0, %c0_i32_1 : i32, i32, i32, i32
  }
  func.func @transform_1(%arg0: i32, %arg1: i32) -> (i32, i32, i32) {
    %c0_i32 = arith.constant 0 : i32
    %c0_i32_0 = arith.constant 0 : i32
    %c0_i32_1 = arith.constant 0 : i32
    return %arg1, %c0_i32, %c0_i32_0 : i32, i32, i32
  }
  func.func @transform_2(%arg0: i32, %arg1: i32) -> (i32, i32, i32) {
    %c0_i32 = arith.constant 0 : i32
    %c0_i32_0 = arith.constant 0 : i32
    %c0_i32_1 = arith.constant 0 : i32
    return %arg1, %c0_i32, %c0_i32_0 : i32, i32, i32
  }
  func.func @transform_3(%arg0: i32, %arg1: i32) -> (i32, i32, i32) {
    %c0_i32 = arith.constant 0 : i32
    %c0_i32_0 = arith.constant 0 : i32
    %c0_i32_1 = arith.constant 0 : i32
    return %arg1, %c0_i32, %c0_i32_0 : i32, i32, i32
  }
  func.func @transform_4(%arg0: i32, %arg1: i32) -> (i32, i32, i32, i32) {
    %c0_i32 = arith.constant 0 : i32
    %c0_i32_0 = arith.constant 0 : i32
    %c0_i32_1 = arith.constant 0 : i32
    %c0_i32_2 = arith.constant 0 : i32
    return %arg1, %c0_i32, %c0_i32_0, %c0_i32_1 : i32, i32, i32, i32
  }
  func.func @transform_5(%arg0: i32, %arg1: i32) -> (i32, i32, i32) {
    %c0_i32 = arith.constant 0 : i32
    %c0_i32_0 = arith.constant 0 : i32
    %c0_i32_1 = arith.constant 0 : i32
    return %arg1, %c0_i32, %c0_i32_0 : i32, i32, i32
  }
  func.func @transform_6(%arg0: i32, %arg1: i32) -> (i32, i32, i32) {
    %c0_i32 = arith.constant 0 : i32
    %c0_i32_0 = arith.constant 0 : i32
    %c0_i32_1 = arith.constant 0 : i32
    return %arg1, %c0_i32, %c0_i32_0 : i32, i32, i32
  }
  func.func @transform_7(%arg0: i32, %arg1: i32) -> (i32, i32, i32, i32) {
    %c0_i32 = arith.constant 0 : i32
    %c0_i32_0 = arith.constant 0 : i32
    %c0_i32_1 = arith.constant 0 : i32
    return %arg0, %c0_i32, %c0_i32_0, %arg1 : i32, i32, i32, i32
  }
  func.func @transform_8(%arg0: i32, %arg1: i32) -> (i32, i32, i32) {
    %c0_i32 = arith.constant 0 : i32
    %c0_i32_0 = arith.constant 0 : i32
    return %arg0, %c0_i32, %arg1 : i32, i32, i32
  }
}

</mosaic_0001>

<llo_original>
// kernel: tpu_custom_call.1
$region0: #{tpu_custom_call.1}
  #allocation0 [shape = 'u32[]', space=smem, size = 0x4, offset = 0x4, fixed_abs, tag = 'smem constant byte address 0x4 - core index']
  #allocation1 [shape = 'u32[72,128]{1,0:T(1,128)}', space=vmem, size = 0x9000, scoped, tag = 'internal scratch']
  #allocation2 [shape = 'f32[18,32,128]{2,1,0:T(8,128)}', space=vmem, size = 0x48000, scoped, tag = 'scratch operand']
  %s0 = inlined_call_operand.hbm [shape: f32[2,16,16,128], index: 0, kind: input, shape index: {}]
  %s1 = inlined_call_operand.hbm [shape: bf16[1,128,128], index: 1, kind: input, shape index: {}]
  %s2 = inlined_call_operand.vmem [shape: f32[1,1,128], index: 2, kind: input, shape index: {}]
  %s3 = inlined_call_operand.vmem [shape: f32[1,1,128], index: 3, kind: input, shape index: {}]
  %s4 = inlined_call_operand.hbm [shape: bf16[1,9,128,128], index: 4, kind: input, shape index: {}]
  %s5 = inlined_call_operand.vmem [shape: f32[1,1,128], index: 5, kind: input, shape index: {}]
  %s6 = inlined_call_operand.vmem [shape: f32[1,1,128], index: 6, kind: input, shape index: {}]
  %s7 = inlined_call_operand.hbm [shape: bf16[2,8,8,128], index: 7, kind: output, shape index: {0}]
  %s8 = inlined_call_operand.hbm [shape: f32[2,1,128], index: 8, kind: output, shape index: {1}]
  %9 = xla_tuple %s7, %s8
  %s10 = sld [smem:[#allocation0]]
  $region88: #{tpu_custom_call.1} parent=0
    _
  %s12 = ssub.s32 1, %s10
  %s13 = scalar_select 0, %s12, %s10
  $region1: #{tpu_custom_call.1} parent=0
    #allocation3 [shape = 'u8[262144]{0}', space=vmem, size = 0x40000, scoped, tag = 'input window, operand 0']
    #allocation4 [shape = 's32[2]{0}', space=sflag, size = 0x8, scoped, tag = 'scoped memory for tpu_custom_call.1']
    #allocation5 [shape = 's32[2]{0}', space=sflag, size = 0x8, scoped, tag = 'scoped memory for tpu_custom_call.1']
    #allocation6 [shape = 'u8[32768]{0}', space=vmem, size = 0x8000, scoped, tag = 'input window, operand 1, single buffered']
    #allocation7 [shape = 's32[1]{0}', space=sflag, size = 0x4, scoped, tag = 'scoped memory for tpu_custom_call.1']
    #allocation8 [shape = 'u8[294912]{0}', space=vmem, size = 0x48000, scoped, tag = 'input window, operand 4, single buffered']
    #allocation9 [shape = 'u8[32768]{0}', space=vmem, size = 0x8000, scoped, tag = 'output window, operand 0']
    #allocation10 [shape = 'u8[1024]{0}', space=vmem, size = 0x400, scoped, tag = 'output window, operand 1']
    #allocation11 [shape = 's32[2]{0}', space=sflag, size = 0x8, scoped, tag = 'scoped memory for tpu_custom_call.1']
    %14 = vsyncpa [#allocation4], 0
    %s15 = scalar_lea.sflag [#allocation4], 1
    %16 = vsyncpa %s15, 0
    %17 = vsyncpa [#allocation7], 0
    %18 = vsyncpa [#allocation5], 0
    %s19 = scalar_lea.sflag [#allocation5], 1
    %20 = vsyncpa %s19, 0
    %21 = vsyncpa [#allocation11], 0
    %s22 = scalar_lea.sflag [#allocation11], 1
    %23 = vsyncpa %s22, 0
    loop: start=0, step=1, limit=4
    $region2: #{tpu_custom_call.1} parent=1 // loop_pre_header
      _
    $region3: #{tpu_custom_call.1} parent=1 // loop_header
      %s25 = sphi 0, %s29
      %p26 = scmp.ge.s32.totalorder %s25, 4
      %s32 = sphi 0, %s44
      %s33 = sphi 0, %s40
      %s34 = sphi 0, %s32
      %s35 = sphi 0, %s33
      %s36 = sphi 0, %s34
      %s37 = sphi 0, %s35
      %s47 = sphi 0, %s49
      %s50 = sphi 0, %s47
      %s51 = sphi 0, %s50
      %s67 = sphi 0, %s51
      %s73 = sphi 0, %s75
      %s76 = sphi 0, %s73
      %s77 = sphi 0, %s76
      %s93 = sphi 0, %s77
      %s99 = sphi 0, %s101
      %s102 = sphi 0, %s99
      %s103 = sphi 0, %s102
      %s119 = sphi 0, %s103
      %s125 = sphi 0, %s127
      %s128 = sphi 0, %s125
      %s129 = sphi 0, %s128
      %s145 = sphi 0, %s129
      %s151 = sphi 0, %s153
      %s154 = sphi 0, %s151
      %s155 = sphi 0, %s154
      %s171 = sphi 0, %s155
      %s177 = sphi 0, %s179
      %s180 = sphi 0, %s177
      %s181 = sphi 0, %s180
      %s197 = sphi 0, %s181
      %s203 = sphi 0, %s205
      %s206 = sphi 0, %s203
      %s207 = sphi 0, %s206
      %s223 = sphi 0, %s207
      %s231 = sphi 0, %s233
      %s234 = sphi 0, %s231
      %s235 = sphi 0, %s234
      %s251 = sphi 0, %s235
      %s259 = sphi 0, %s261
      %s262 = sphi 0, %s259
      %s263 = sphi 0, %s262
      %s279 = sphi 0, %s263
    $region4: #{tpu_custom_call.1} parent=1 // loop_header_branch
      %28 = sbr.rel (%p26) target = $region8
    $region5: #{tpu_custom_call.1} parent=1 // loop_body
      %s30 = ssub.s32 %s25, 1
      %s31 = ssub.s32 %s25, 2
      %s38 = sadd.s32 1, %s33
      %p39 = scmp.ge.s32.totalorder %s38, 1
      %s40 = scalar_select %p39, 0, %s38
      %s41 = sadd.s32 1, %s32
      %s42 = scalar_select %p39, %s41, %s32
      %p43 = scmp.ge.s32.totalorder %s42, 2
      %s44 = scalar_select %p43, 0, %s42
      %s45 = ssub.s32 %s32, %s44
      %p46 = scmp.eq.s32.totalorder %s45, 0
      %s48 = sadd.s32 %s47, 1
      %s49 = scalar_select %p46, %s47, %s48
      %p52 = pneg %p46
      %p53 = scmp.eq.s32.totalorder %s25, 1
      %p54 = por %p52, %p53
      %p55 = scmp.ne.s32.totalorder %s47, %s50
      %p56 = scmp.eq.s32.totalorder %s25, 0
      %p57 = por %p55, %p56
      %p58 = scmp.ne.s32.totalorder %s47, %s50
      %p59 = scmp.eq.s32.totalorder %s30, 1
      %p60 = por %p58, %p59
      %p61 = scmp.ne.s32.totalorder %s50, %s51
      %p62 = scmp.eq.s32.totalorder %s30, 0
      %p63 = por %p61, %p62
      %p64 = scmp.ne.s32.totalorder %s50, %s51
      %p65 = scmp.eq.s32.totalorder %s31, 1
      %p66 = por %p64, %p65
      %p68 = scmp.ne.s32.totalorder %s51, %s67
      %p69 = scmp.eq.s32.totalorder %s31, 0
      %p70 = por %p68, %p69
      %s71 = ssub.s32 %s33, %s40
      %p72 = scmp.eq.s32.totalorder %s71, 0
      %s74 = sadd.s32 %s73, 1
      %s75 = scalar_select %p72, %s73, %s74
      %p78 = pneg %p72
      %p79 = scmp.eq.s32.totalorder %s25, 1
      %p80 = por %p78, %p79
      %p81 = scmp.ne.s32.totalorder %s73, %s76
      %p82 = scmp.eq.s32.totalorder %s25, 0
      %p83 = por %p81, %p82
      %p84 = scmp.ne.s32.totalorder %s73, %s76
      %p85 = scmp.eq.s32.totalorder %s30, 1
      %p86 = por %p84, %p85
      %p87 = scmp.ne.s32.totalorder %s76, %s77
      %p88 = scmp.eq.s32.totalorder %s30, 0
      %p89 = por %p87, %p88
      %p90 = scmp.ne.s32.totalorder %s76, %s77
      %p91 = scmp.eq.s32.totalorder %s31, 1
      %p92 = por %p90, %p91
      %p94 = scmp.ne.s32.totalorder %s77, %s93
      %p95 = scmp.eq.s32.totalorder %s31, 0
      %p96 = por %p94, %p95
      %s97 = ssub.s32 %s33, %s40
      %p98 = scmp.eq.s32.totalorder %s97, 0
      %s100 = sadd.s32 %s99, 1
      %s101 = scalar_select %p98, %s99, %s100
      %p104 = pneg %p98
      %p105 = scmp.eq.s32.totalorder %s25, 1
      %p106 = por %p104, %p105
      %p107 = scmp.ne.s32.totalorder %s99, %s102
      %p108 = scmp.eq.s32.totalorder %s25, 0
      %p109 = por %p107, %p108
      %p110 = scmp.ne.s32.totalorder %s99, %s102
      %p111 = scmp.eq.s32.totalorder %s30, 1
      %p112 = por %p110, %p111
      %p113 = scmp.ne.s32.totalorder %s102, %s103
      %p114 = scmp.eq.s32.totalorder %s30, 0
      %p115 = por %p113, %p114
      %p116 = scmp.ne.s32.totalorder %s102, %s103
      %p117 = scmp.eq.s32.totalorder %s31, 1
      %p118 = por %p116, %p117
      %p120 = scmp.ne.s32.totalorder %s103, %s119
      %p121 = scmp.eq.s32.totalorder %s31, 0
      %p122 = por %p120, %p121
      %s123 = ssub.s32 %s33, %s40
      %p124 = scmp.eq.s32.totalorder %s123, 0
      %s126 = sadd.s32 %s125, 1
      %s127 = scalar_select %p124, %s125, %s126
      %p130 = pneg %p124
      %p131 = scmp.eq.s32.totalorder %s25, 1
      %p132 = por %p130, %p131
      %p133 = scmp.ne.s32.totalorder %s125, %s128
      %p134 = scmp.eq.s32.totalorder %s25, 0
      %p135 = por %p133, %p134
      %p136 = scmp.ne.s32.totalorder %s125, %s128
      %p137 = scmp.eq.s32.totalorder %s30, 1
      %p138 = por %p136, %p137
      %p139 = scmp.ne.s32.totalorder %s128, %s129
      %p140 = scmp.eq.s32.totalorder %s30, 0
      %p141 = por %p139, %p140
      %p142 = scmp.ne.s32.totalorder %s128, %s129
      %p143 = scmp.eq.s32.totalorder %s31, 1
      %p144 = por %p142, %p143
      %p146 = scmp.ne.s32.totalorder %s129, %s145
      %p147 = scmp.eq.s32.totalorder %s31, 0
      %p148 = por %p146, %p147
      %s149 = ssub.s32 %s33, %s40
      %p150 = scmp.eq.s32.totalorder %s149, 0
      %s152 = sadd.s32 %s151, 1
      %s153 = scalar_select %p150, %s151, %s152
      %p156 = pneg %p150
      %p157 = scmp.eq.s32.totalorder %s25, 1
      %p158 = por %p156, %p157
      %p159 = scmp.ne.s32.totalorder %s151, %s154
      %p160 = scmp.eq.s32.totalorder %s25, 0
      %p161 = por %p159, %p160
      %p162 = scmp.ne.s32.totalorder %s151, %s154
      %p163 = scmp.eq.s32.totalorder %s30, 1
      %p164 = por %p162, %p163
      %p165 = scmp.ne.s32.totalorder %s154, %s155
      %p166 = scmp.eq.s32.totalorder %s30, 0
      %p167 = por %p165, %p166
      %p168 = scmp.ne.s32.totalorder %s154, %s155
      %p169 = scmp.eq.s32.totalorder %s31, 1
      %p170 = por %p168, %p169
      %p172 = scmp.ne.s32.totalorder %s155, %s171
      %p173 = scmp.eq.s32.totalorder %s31, 0
      %p174 = por %p172, %p173
      %s175 = ssub.s32 %s33, %s40
      %p176 = scmp.eq.s32.totalorder %s175, 0
      %s178 = sadd.s32 %s177, 1
      %s179 = scalar_select %p176, %s177, %s178
      %p182 = pneg %p176
      %p183 = scmp.eq.s32.totalorder %s25, 1
      %p184 = por %p182, %p183
      %p185 = scmp.ne.s32.totalorder %s177, %s180
      %p186 = scmp.eq.s32.totalorder %s25, 0
      %p187 = por %p185, %p186
      %p188 = scmp.ne.s32.totalorder %s177, %s180
      %p189 = scmp.eq.s32.totalorder %s30, 1
      %p190 = por %p188, %p189
      %p191 = scmp.ne.s32.totalorder %s180, %s181
      %p192 = scmp.eq.s32.totalorder %s30, 0
      %p193 = por %p191, %p192
      %p194 = scmp.ne.s32.totalorder %s180, %s181
      %p195 = scmp.eq.s32.totalorder %s31, 1
      %p196 = por %p194, %p195
      %p198 = scmp.ne.s32.totalorder %s181, %s197
      %p199 = scmp.eq.s32.totalorder %s31, 0
      %p200 = por %p198, %p199
      %s201 = ssub.s32 %s33, %s40
      %p202 = scmp.eq.s32.totalorder %s201, 0
      %s204 = sadd.s32 %s203, 1
      %s205 = scalar_select %p202, %s203, %s204
      %p208 = pneg %p202
      %p209 = scmp.eq.s32.totalorder %s25, 1
      %p210 = por %p208, %p209
      %p211 = scmp.ne.s32.totalorder %s203, %s206
      %p212 = scmp.eq.s32.totalorder %s25, 0
      %p213 = por %p211, %p212
      %p214 = scmp.ne.s32.totalorder %s203, %s206
      %p215 = scmp.eq.s32.totalorder %s30, 1
      %p216 = por %p214, %p215
      %p217 = scmp.ne.s32.totalorder %s206, %s207
      %p218 = scmp.eq.s32.totalorder %s30, 0
      %p219 = por %p217, %p218
      %p220 = scmp.ne.s32.totalorder %s206, %s207
      %p221 = scmp.eq.s32.totalorder %s31, 1
      %p222 = por %p220, %p221
      %p224 = scmp.ne.s32.totalorder %s207, %s223
      %p225 = scmp.eq.s32.totalorder %s31, 0
      %p226 = por %p224, %p225
      %s227 = ssub.s32 %s32, %s44
      %s228 = ssub.s32 %s33, %s40
      %s229 = sor.u32 %s227, %s228
      %p230 = scmp.eq.s32.totalorder %s229, 0
      %s232 = sadd.s32 %s231, 1
      %s233 = scalar_select %p230, %s231, %s232
      %p236 = pneg %p230
      %p237 = scmp.eq.s32.totalorder %s25, 1
      %p238 = por %p236, %p237
      %p239 = scmp.ne.s32.totalorder %s231, %s234
      %p240 = scmp.eq.s32.totalorder %s25, 0
      %p241 = por %p239, %p240
      %p242 = scmp.ne.s32.totalorder %s231, %s234
      %p243 = scmp.eq.s32.totalorder %s30, 1
      %p244 = por %p242, %p243
      %p245 = scmp.ne.s32.totalorder %s234, %s235
      %p246 = scmp.eq.s32.totalorder %s30, 0
      %p247 = por %p245, %p246
      %p248 = scmp.ne.s32.totalorder %s234, %s235
      %p249 = scmp.eq.s32.totalorder %s31, 1
      %p250 = por %p248, %p249
      %p252 = scmp.ne.s32.totalorder %s235, %s251
      %p253 = scmp.eq.s32.totalorder %s31, 0
      %p254 = por %p252, %p253
      %s255 = ssub.s32 %s32, %s44
      %s256 = ssub.s32 %s33, %s40
      %s257 = sor.u32 %s255, %s256
      %p258 = scmp.eq.s32.totalorder %s257, 0
      %s260 = sadd.s32 %s259, 1
      %s261 = scalar_select %p258, %s259, %s260
      %p264 = pneg %p258
      %p265 = scmp.eq.s32.totalorder %s25, 1
      %p266 = por %p264, %p265
      %p267 = scmp.ne.s32.totalorder %s259, %s262
      %p268 = scmp.eq.s32.totalorder %s25, 0
      %p269 = por %p267, %p268
      %p270 = scmp.ne.s32.totalorder %s259, %s262
      %p271 = scmp.eq.s32.totalorder %s30, 1
      %p272 = por %p270, %p271
      %p273 = scmp.ne.s32.totalorder %s262, %s263
      %p274 = scmp.eq.s32.totalorder %s30, 0
      %p275 = por %p273, %p274
      %p276 = scmp.ne.s32.totalorder %s262, %s263
      %p277 = scmp.eq.s32.totalorder %s31, 1
      %p278 = por %p276, %p277
      %p280 = scmp.ne.s32.totalorder %s263, %s279
      %p281 = scmp.eq.s32.totalorder %s31, 0
      %p282 = por %p280, %p281
      %p283 = scmp.le.s32.totalorder 1, %s25
      %p284 = scmp.lt.s32.totalorder %s25, 3
      %p285 = pnand %p283, %p284
      %p286 = pneg %p285
      // Predicated region
      $region9: #{tpu_custom_call.1} parent=5 // pred_check
        _
      $region10: #{tpu_custom_call.1} parent=5 // pred_check_branch
        %288 = sbr.rel (%p285) target = $region12
      $region11: #{tpu_custom_call.1} parent=5 // pred_region
        %s289 = ssub.s32 %s25, 1
        // Predicated region
        $region13: #{tpu_custom_call.1} parent=11 // pred_check
          %p290 = pneg %p89
        $region14: #{tpu_custom_call.1} parent=11 // pred_check_branch
          %292 = sbr.rel (%p290) target = $region16
        $region15: #{tpu_custom_call.1} parent=11 // pred_region
          %294 = vsyncadd [#allocation7], 0
          %s295 = smul.addr %s35, 16
          %s296 = smul.addr %s295, 4
          %s297 = scalar_lea.hbm %s1, %s296
          %s298 = sshll.u32 %s297, 4
          %s299 = int_to_ptr.hbm [resolvable:$true] %s298
          %s300 = sshll.u32 [#allocation6], 4
          %s301 = int_to_ptr.vmem [resolvable:$true] %s300
          %306 = dma.hbm_to_vmem [thread:$0]  %s299, 1024, %s301, [#allocation7], 64, 64, 4
        $region16: #{tpu_custom_call.1} parent=11 // pred_fallthru
          _
        // Predicated region
        $region17: #{tpu_custom_call.1} parent=11 // pred_check
          %p307 = pneg %p115
        $region18: #{tpu_custom_call.1} parent=11 // pred_check_branch
          %309 = sbr.rel (%p307) target = $region20
        $region19: #{tpu_custom_call.1} parent=11 // pred_region
          %p310 = scmp.lt.s32.totalorder %s35, 0
          %s311 = scalar_select %p310, %s35, 0
          %s312 = scalar_lea.vmem %s2, %s311
        $region20: #{tpu_custom_call.1} parent=11 // pred_fallthru
          _
        // Predicated region
        $region21: #{tpu_custom_call.1} parent=11 // pred_check
          %p313 = pneg %p141
        $region22: #{tpu_custom_call.1} parent=11 // pred_check_branch
          %315 = sbr.rel (%p313) target = $region24
        $region23: #{tpu_custom_call.1} parent=11 // pred_region
          %p316 = scmp.lt.s32.totalorder %s35, 0
          %s317 = scalar_select %p316, %s35, 0
          %s318 = scalar_lea.vmem %s3, %s317
        $region24: #{tpu_custom_call.1} parent=11 // pred_fallthru
          _
        // Predicated region
        $region25: #{tpu_custom_call.1} parent=11 // pred_check
          %p319 = pneg %p167
        $region26: #{tpu_custom_call.1} parent=11 // pred_check_branch
          %321 = sbr.rel (%p319) target = $region28
        $region27: #{tpu_custom_call.1} parent=11 // pred_region
          %323 = vsyncadd [#allocation7], 0
          %s324 = smul.addr %s35, 144
          %s325 = smul.addr %s324, 4
          %s326 = scalar_lea.hbm %s4, %s325
          %s327 = sshll.u32 %s326, 4
          %s328 = int_to_ptr.hbm [resolvable:$true] %s327
          %s329 = sshll.u32 [#allocation8], 4
          %s330 = int_to_ptr.vmem [resolvable:$true] %s329
          %335 = dma.hbm_to_vmem [thread:$0]  %s328, 9216, %s330, [#allocation7], 64, 64, 4
        $region28: #{tpu_custom_call.1} parent=11 // pred_fallthru
          _
        // Predicated region
        $region29: #{tpu_custom_call.1} parent=11 // pred_check
          %p336 = pneg %p193
        $region30: #{tpu_custom_call.1} parent=11 // pred_check_branch
          %338 = sbr.rel (%p336) target = $region32
        $region31: #{tpu_custom_call.1} parent=11 // pred_region
          %p339 = scmp.lt.s32.totalorder %s35, 0
          %s340 = scalar_select %p339, %s35, 0
          %s341 = scalar_lea.vmem %s5, %s340
        $region32: #{tpu_custom_call.1} parent=11 // pred_fallthru
          _
        // Predicated region
        $region33: #{tpu_custom_call.1} parent=11 // pred_check
          %p342 = pneg %p219
        $region34: #{tpu_custom_call.1} parent=11 // pred_check_branch
          %344 = sbr.rel (%p342) target = $region36
        $region35: #{tpu_custom_call.1} parent=11 // pred_region
          %p345 = scmp.lt.s32.totalorder %s35, 0
          %s346 = scalar_select %p345, %s35, 0
          %s347 = scalar_lea.vmem %s6, %s346
        $region36: #{tpu_custom_call.1} parent=11 // pred_fallthru
          _
      $region12: #{tpu_custom_call.1} parent=5 // pred_fallthru
        _
      %p348 = scmp.lt.s32.totalorder %s25, 2
      // Predicated region
      $region37: #{tpu_custom_call.1} parent=5 // pred_check
        %p349 = pneg %p348
      $region38: #{tpu_custom_call.1} parent=5 // pred_check_branch
        %351 = sbr.rel (%p349) target = $region40
      $region39: #{tpu_custom_call.1} parent=5 // pred_region
        // Predicated region
        $region41: #{tpu_custom_call.1} parent=39 // pred_check
          %p352 = pneg %p57
        $region42: #{tpu_custom_call.1} parent=39 // pred_check_branch
          %354 = sbr.rel (%p352) target = $region44
        $region43: #{tpu_custom_call.1} parent=39 // pred_region
          %s355 = sand.u32 %s47, 1
          %s356 = scalar_lea.sflag [#allocation4], %s355
          %s357 = sand.u32 %s47, 1
          %s358 = smul.addr %s357, 256
          %s359 = scalar_lea.vmem [#allocation3], %s358
          %361 = vsyncadd %s356, 0
          %s362 = smul.addr %s32, 32
          %s363 = smul.addr %s362, 8
          %s364 = scalar_lea.hbm %s0, %s363
          %s365 = sshll.u32 %s364, 4
          %s366 = int_to_ptr.hbm [resolvable:$true] %s365
          %s367 = sshll.u32 %s359, 4
          %s368 = int_to_ptr.vmem [resolvable:$true] %s367
          %373 = dma.hbm_to_vmem [thread:$0]  %s366, 4096, %s368, %s356, 128, 128, 8
        $region44: #{tpu_custom_call.1} parent=39 // pred_fallthru
          _
      $region40: #{tpu_custom_call.1} parent=5 // pred_fallthru
        _
      %p374 = scmp.le.s32.totalorder 1, %s25
      %p375 = scmp.lt.s32.totalorder %s25, 3
      %p376 = pnand %p374, %p375
      %p377 = pneg %p376
      // Predicated region
      $region45: #{tpu_custom_call.1} parent=5 // pred_check
        _
      $region46: #{tpu_custom_call.1} parent=5 // pred_check_branch
        %379 = sbr.rel (%p376) target = $region48
      $region47: #{tpu_custom_call.1} parent=5 // pred_region
        %s380 = ssub.s32 %s25, 1
        %s381 = sand.u32 %s50, 1
        %s382 = scalar_lea.sflag [#allocation4], %s381
        %s383 = sand.u32 %s50, 1
        %s384 = smul.addr %s383, 256
        %s385 = scalar_lea.vmem [#allocation3], %s384
        // Predicated region
        $region49: #{tpu_custom_call.1} parent=47 // pred_check
          %p386 = pneg %p63
        $region50: #{tpu_custom_call.1} parent=47 // pred_check_branch
          %388 = sbr.rel (%p386) target = $region52
        $region51: #{tpu_custom_call.1} parent=47 // pred_region
          %390 = dma.done %s382, 4096
        $region52: #{tpu_custom_call.1} parent=47 // pred_fallthru
          _
        // Predicated region
        $region53: #{tpu_custom_call.1} parent=47 // pred_check
          %p391 = pneg %p89
        $region54: #{tpu_custom_call.1} parent=47 // pred_check_branch
          %393 = sbr.rel (%p391) target = $region56
        $region55: #{tpu_custom_call.1} parent=47 // pred_region
          %395 = dma.done [#allocation7], 1024
        $region56: #{tpu_custom_call.1} parent=47 // pred_fallthru
          _
        // Predicated region
        $region57: #{tpu_custom_call.1} parent=47 // pred_check
          %p396 = pneg %p167
        $region58: #{tpu_custom_call.1} parent=47 // pred_check_branch
          %398 = sbr.rel (%p396) target = $region60
        $region59: #{tpu_custom_call.1} parent=47 // pred_region
          %400 = dma.done [#allocation7], 9216
        $region60: #{tpu_custom_call.1} parent=47 // pred_fallthru
          _
        %s401 = sand.u32 %s50, 1
        %s402 = scalar_lea.sflag [#allocation4], %s401
        %s403 = sand.u32 %s50, 1
        %s404 = smul.addr %s403, 256
        %s405 = scalar_lea.vmem [#allocation3], %s404
        %p406 = pneg %p63
        %p407 = pneg %p60
        %p408 = pneg %p89
        %p409 = pneg %p86
        %p410 = scmp.lt.s32.totalorder %s35, 0
        %s411 = scalar_select %p410, %s35, 0
        %s412 = scalar_lea.vmem %s2, %s411
        %p413 = pneg %p115
        %p414 = pneg %p112
        %p415 = scmp.lt.s32.totalorder %s35, 0
        %s416 = scalar_select %p415, %s35, 0
        %s417 = scalar_lea.vmem %s3, %s416
        %p418 = pneg %p141
        %p419 = pneg %p138
        %p420 = pneg %p167
        %p421 = pneg %p164
        %p422 = scmp.lt.s32.totalorder %s35, 0
        %s423 = scalar_select %p422, %s35, 0
        %s424 = scalar_lea.vmem %s5, %s423
        %p425 = pneg %p193
        %p426 = pneg %p190
        %p427 = scmp.lt.s32.totalorder %s35, 0
        %s428 = scalar_select %p427, %s35, 0
        %s429 = scalar_lea.vmem %s6, %s428
        %p430 = pneg %p219
        %p431 = pneg %p216
        %p432 = pneg %p247
        %p433 = pneg %p244
        %s434 = sand.u32 %s234, 1
        %s435 = scalar_lea.sflag [#allocation5], %s434
        %s436 = sand.u32 %s234, 1
        %s437 = smul.addr %s436, 32
        %s438 = scalar_lea.vmem [#allocation9], %s437
        %p439 = pneg %p275
        %p440 = pneg %p272
        %s441 = sand.u32 %s262, 1
        %s442 = scalar_lea.sflag [#allocation11], %s441
        %s443 = sand.u32 %s262, 1
        %s444 = scalar_lea.vmem [#allocation10], %s443
        %p445 = scmp.lt.s32.totalorder %s35, 0
        %s446 = scalar_select %p445, %s35, 0
        %s447 = scalar_lea.vmem %s2, %s446
        %p448 = scmp.lt.s32.totalorder %s35, 0
        %s449 = scalar_select %p448, %s35, 0
        %s450 = scalar_lea.vmem %s3, %s449
        %p451 = scmp.lt.s32.totalorder %s35, 0
        %s452 = scalar_select %p451, %s35, 0
        %s453 = scalar_lea.vmem %s5, %s452
        %p454 = scmp.lt.s32.totalorder %s35, 0
        %s455 = scalar_select %p454, %s35, 0
        %s456 = scalar_lea.vmem %s6, %s455
        %457 = vst [vmem:[#allocation2] sm:$0xff] 0.0
        %458 = vst [vmem:[#allocation2 + $0x20] sm:$0xff] 0.0
        %459 = vst [vmem:[#allocation2 + $0x40] sm:$0xff] 0.0
        %460 = vst [vmem:[#allocation2 + $0x60] sm:$0xff] 0.0
        %461 = vst [vmem:[#allocation2 + $0x80] sm:$0xff] 0.0
        %462 = vst [vmem:[#allocation2 + $0xa0] sm:$0xff] 0.0
        %463 = vst [vmem:[#allocation2 + $0xc0] sm:$0xff] 0.0
        %464 = vst [vmem:[#allocation2 + $0xe0] sm:$0xff] 0.0
        %465 = vst [vmem:[#allocation2 + $0x100] sm:$0xff] 0.0
        %466 = vst [vmem:[#allocation2 + $0x120] sm:$0xff] 0.0
        %467 = vst [vmem:[#allocation2 + $0x140] sm:$0xff] 0.0
        %468 = vst [vmem:[#allocation2 + $0x160] sm:$0xff] 0.0
        %469 = vst [vmem:[#allocation2 + $0x180] sm:$0xff] 0.0
        %470 = vst [vmem:[#allocation2 + $0x1a0] sm:$0xff] 0.0
        %471 = vst [vmem:[#allocation2 + $0x1c0] sm:$0xff] 0.0
        %472 = vst [vmem:[#allocation2 + $0x1e0] sm:$0xff] 0.0
        %473 = vst [vmem:[#allocation2 + $0x200] sm:$0xff] 0.0
        %474 = vst [vmem:[#allocation2 + $0x220] sm:$0xff] 0.0
        %475 = vst [vmem:[#allocation2 + $0x18] sm:$0xff] 0.0
        %476 = vst [vmem:[#allocation2 + $0x38] sm:$0xff] 0.0
        %477 = vst [vmem:[#allocation2 + $0x58] sm:$0xff] 0.0
        %478 = vst [vmem:[#allocation2 + $0x78] sm:$0xff] 0.0
        %479 = vst [vmem:[#allocation2 + $0x98] sm:$0xff] 0.0
        %480 = vst [vmem:[#allocation2 + $0xb8] sm:$0xff] 0.0
        %481 = vst [vmem:[#allocation2 + $0xd8] sm:$0xff] 0.0
        %482 = vst [vmem:[#allocation2 + $0xf8] sm:$0xff] 0.0
        %483 = vst [vmem:[#allocation2 + $0x118] sm:$0xff] 0.0
        %484 = vst [vmem:[#allocation2 + $0x138] sm:$0xff] 0.0
        %485 = vst [vmem:[#allocation2 + $0x158] sm:$0xff] 0.0
        %486 = vst [vmem:[#allocation2 + $0x178] sm:$0xff] 0.0
        %487 = vst [vmem:[#allocation2 + $0x198] sm:$0xff] 0.0
        %488 = vst [vmem:[#allocation2 + $0x1b8] sm:$0xff] 0.0
        %489 = vst [vmem:[#allocation2 + $0x1d8] sm:$0xff] 0.0
        %490 = vst [vmem:[#allocation2 + $0x1f8] sm:$0xff] 0.0
        %491 = vst [vmem:[#allocation2 + $0x218] sm:$0xff] 0.0
        %492 = vst [vmem:[#allocation2 + $0x238] sm:$0xff] 0.0
        %493 = vst [vmem:[#allocation2 + $0x8] sm:$0xff] 0.0
        %494 = vst [vmem:[#allocation2 + $0x10] sm:$0xff] 0.0
        %s495 = scalar_lea.vmem [#allocation2], 544
        %496 = vst [vmem:[%s495 + $0x8] sm:$0xff] 0.0
        %497 = vst [vmem:[%s495 + $0x10] sm:$0xff] 0.0
        loop: start=0, step=1, limit=2
        $region61: #{tpu_custom_call.1} parent=47 // loop_pre_header
          _
        $region62: #{tpu_custom_call.1} parent=47 // loop_header
          %s499 = sphi 0, %s503
          %p500 = scmp.ge.s32.totalorder %s499, 2
        $region63: #{tpu_custom_call.1} parent=47 // loop_header_branch
          %502 = sbr.rel (%p500) target = $region67
        $region64: #{tpu_custom_call.1} parent=47 // loop_body
          %s504 = smul.u32 %s499, 8
          %s505 = smul.u32 %s504, 16
          %s506 = scalar_lea.vmem %s385, %s505 [#allocation3]
          %v507 = vld [vmem:[%s506] sm:$0xff]
          %v508 = vld [vmem:[%s506 + $0x8] sm:$0xff]
          %v509 = vld [vmem:[%s506 + $0x10] sm:$0xff]
          %v510 = vld [vmem:[%s506 + $0x18] sm:$0xff]
          %v511 = vld [vmem:[%s506 + $0x20] sm:$0xff]
          %v512 = vld [vmem:[%s506 + $0x28] sm:$0xff]
          %v513 = vld [vmem:[%s506 + $0x30] sm:$0xff]
          %v514 = vld [vmem:[%s506 + $0x38] sm:$0xff]
          %v515 = vld [vmem:[%s506 + $0x40] sm:$0xff]
          %v516 = vld [vmem:[%s506 + $0x48] sm:$0xff]
          %v517 = vld [vmem:[%s506 + $0x50] sm:$0xff]
          %v518 = vld [vmem:[%s506 + $0x58] sm:$0xff]
          %v519 = vld [vmem:[%s506 + $0x60] sm:$0xff]
          %v520 = vld [vmem:[%s506 + $0x68] sm:$0xff]
          %v521 = vld [vmem:[%s506 + $0x70] sm:$0xff]
          %v522 = vld [vmem:[%s506 + $0x78] sm:$0xff]
          %v523 = vpack.c.bf16 %v508, %v507
          %v524 = vpack.c.bf16 %v510, %v509
          %v525 = vpack.c.bf16 %v512, %v511
          %v526 = vpack.c.bf16 %v514, %v513
          %v527 = vpack.c.bf16 %v516, %v515
          %v528 = vpack.c.bf16 %v518, %v517
          %v529 = vpack.c.bf16 %v520, %v519
          %v530 = vpack.c.bf16 %v522, %v521
          %v531 = vld [vmem:[#allocation6] sm:$0xf]
          %v532 = vld [vmem:[#allocation6 + $0x4] sm:$0xf]
          %v533 = vld [vmem:[#allocation6 + $0x8] sm:$0xf]
          %v534 = vld [vmem:[#allocation6 + $0xc] sm:$0xf]
          %v535 = vld [vmem:[#allocation6 + $0x10] sm:$0xf]
          %v536 = vld [vmem:[#allocation6 + $0x14] sm:$0xf]
          %v537 = vld [vmem:[#allocation6 + $0x18] sm:$0xf]
          %v538 = vld [vmem:[#allocation6 + $0x1c] sm:$0xf]
          %v539 = vld [vmem:[#allocation6 + $0x20] sm:$0xf]
          %v540 = vld [vmem:[#allocation6 + $0x24] sm:$0xf]
          %v541 = vld [vmem:[#allocation6 + $0x28] sm:$0xf]
          %v542 = vld [vmem:[#allocation6 + $0x2c] sm:$0xf]
          %v543 = vld [vmem:[#allocation6 + $0x30] sm:$0xf]
          %v544 = vld [vmem:[#allocation6 + $0x34] sm:$0xf]
          %v545 = vld [vmem:[#allocation6 + $0x38] sm:$0xf]
          %v546 = vld [vmem:[#allocation6 + $0x3c] sm:$0xf]
          %v563 = vunpack.c.l.b16 %v531
          %v564 = vunpack.c.l.b16 %v532
          %v565 = vunpack.c.l.b16 %v533
          %v566 = vunpack.c.l.b16 %v534
          %v567 = vunpack.c.l.b16 %v535
          %v568 = vunpack.c.l.b16 %v536
          %v569 = vunpack.c.l.b16 %v537
          %v570 = vunpack.c.l.b16 %v538
          %v571 = vunpack.c.l.b16 %v539
          %v572 = vunpack.c.l.b16 %v540
          %v573 = vunpack.c.l.b16 %v541
          %v574 = vunpack.c.l.b16 %v542
          %v575 = vunpack.c.l.b16 %v543
          %v576 = vunpack.c.l.b16 %v544
          %v577 = vunpack.c.l.b16 %v545
          %v578 = vunpack.c.l.b16 %v546
          %v579 = vpack.c.b16 %v564, %v563
          %v580 = vpack.c.b16 %v566, %v565
          %v581 = vpack.c.b16 %v568, %v567
          %v582 = vpack.c.b16 %v570, %v569
          %v583 = vpack.c.b16 %v572, %v571
          %v584 = vpack.c.b16 %v574, %v573
          %v585 = vpack.c.b16 %v576, %v575
          %v586 = vpack.c.b16 %v578, %v577
          %595 = vmatpush.bf16.msra.mxu0 %v586
          %596 = vmatpush.bf16.msra.mxu0 %v585
          %597 = vmatpush.bf16.msra.mxu0 %v584
          %598 = vmatpush.bf16.msra.mxu0 %v583
          %599 = vmatpush.bf16.msra.mxu0 %v582
          %600 = vmatpush.bf16.msra.mxu0 %v581
          %601 = vmatpush.bf16.msra.mxu0 %v580
          %602 = vmatpush.bf16.msra.mxu0 %v579
          %603 = vmatmul.bf16.gmra.mxu0 %v523
          %v604 = vpop.f32.mrf.mxu0
          %v605 = vadd.f32 0.0, %v604
          %v606 = vpop.f32.mrf.mxu0
          %v607 = vadd.f32 0.0, %v606
          %608 = vmatmul.bf16.gmra.mxu0 %v524
          %v609 = vpop.f32.mrf.mxu0
          %v610 = vadd.f32 0.0, %v609
          %v611 = vpop.f32.mrf.mxu0
          %v612 = vadd.f32 0.0, %v611
          %613 = vmatmul.bf16.gmra.mxu0 %v525
          %v614 = vpop.f32.mrf.mxu0
          %v615 = vadd.f32 0.0, %v614
          %v616 = vpop.f32.mrf.mxu0
          %v617 = vadd.f32 0.0, %v616
          %618 = vmatmul.bf16.gmra.mxu0 %v526
          %v619 = vpop.f32.mrf.mxu0
          %v620 = vadd.f32 0.0, %v619
          %v621 = vpop.f32.mrf.mxu0
          %v622 = vadd.f32 0.0, %v621
          %623 = vmatmul.bf16.gmra.mxu0 %v527
          %v624 = vpop.f32.mrf.mxu0
          %v625 = vadd.f32 0.0, %v624
          %v626 = vpop.f32.mrf.mxu0
          %v627 = vadd.f32 0.0, %v626
          %628 = vmatmul.bf16.gmra.mxu0 %v528
          %v629 = vpop.f32.mrf.mxu0
          %v630 = vadd.f32 0.0, %v629
          %v631 = vpop.f32.mrf.mxu0
          %v632 = vadd.f32 0.0, %v631
          %633 = vmatmul.bf16.gmra.mxu0 %v529
          %v634 = vpop.f32.mrf.mxu0
          %v635 = vadd.f32 0.0, %v634
          %v636 = vpop.f32.mrf.mxu0
          %v637 = vadd.f32 0.0, %v636
          %638 = vmatmul.bf16.gmra.mxu0 %v530
          %v639 = vpop.f32.mrf.mxu0
          %v640 = vadd.f32 0.0, %v639
          %v641 = vpop.f32.mrf.mxu0
          %v642 = vadd.f32 0.0, %v641
          %643 = vdwg.mxu0
          %v644 = vld [vmem:[%s447] sm:$0x1]
          %v646 = vperm.slane %v644, 0
          %v648 = vmul.f32 %v605, %v646
          %v649 = vmul.f32 %v607, %v646
          %v650 = vmul.f32 %v610, %v646
          %v651 = vmul.f32 %v612, %v646
          %v652 = vmul.f32 %v615, %v646
          %v653 = vmul.f32 %v617, %v646
          %v654 = vmul.f32 %v620, %v646
          %v655 = vmul.f32 %v622, %v646
          %v656 = vmul.f32 %v625, %v646
          %v657 = vmul.f32 %v627, %v646
          %v658 = vmul.f32 %v630, %v646
          %v659 = vmul.f32 %v632, %v646
          %v660 = vmul.f32 %v635, %v646
          %v661 = vmul.f32 %v637, %v646
          %v662 = vmul.f32 %v640, %v646
          %v663 = vmul.f32 %v642, %v646
          %v664 = vld [vmem:[%s450] sm:$0x1]
          %v666 = vperm.slane %v664, 0
          %v668 = vadd.f32 %v648, %v666
          %v669 = vadd.f32 %v649, %v666
          %v670 = vadd.f32 %v650, %v666
          %v671 = vadd.f32 %v651, %v666
          %v672 = vadd.f32 %v652, %v666
          %v673 = vadd.f32 %v653, %v666
          %v674 = vadd.f32 %v654, %v666
          %v675 = vadd.f32 %v655, %v666
          %v676 = vadd.f32 %v656, %v666
          %v677 = vadd.f32 %v657, %v666
          %v678 = vadd.f32 %v658, %v666
          %v679 = vadd.f32 %v659, %v666
          %v680 = vadd.f32 %v660, %v666
          %v681 = vadd.f32 %v661, %v666
          %v682 = vadd.f32 %v662, %v666
          %v683 = vadd.f32 %v663, %v666
          %v684 = vmax.f32 %v668, 0.0
          %v685 = vmax.f32 %v669, 0.0
          %v686 = vmax.f32 %v670, 0.0
          %v687 = vmax.f32 %v671, 0.0
          %v688 = vmax.f32 %v672, 0.0
          %v689 = vmax.f32 %v673, 0.0
          %v690 = vmax.f32 %v674, 0.0
          %v691 = vmax.f32 %v675, 0.0
          %v692 = vmax.f32 %v676, 0.0
          %v693 = vmax.f32 %v677, 0.0
          %v694 = vmax.f32 %v678, 0.0
          %v695 = vmax.f32 %v679, 0.0
          %v696 = vmax.f32 %v680, 0.0
          %v697 = vmax.f32 %v681, 0.0
          %v698 = vmax.f32 %v682, 0.0
          %v699 = vmax.f32 %v683, 0.0
          %s700 = sadd.s32 %s504, 1
          %s701 = smul.u32 %s700, 32
          %s702 = scalar_lea.vmem [#allocation2], %s701
          %703 = vst [vmem:[%s702 + $0x8] sm:$0xff] %v684
          %704 = vst [vmem:[%s702 + $0x10] sm:$0xff] %v685
          %705 = vst [vmem:[%s702 + $0x28] sm:$0xff] %v686
          %706 = vst [vmem:[%s702 + $0x30] sm:$0xff] %v687
          %707 = vst [vmem:[%s702 + $0x48] sm:$0xff] %v688
          %708 = vst [vmem:[%s702 + $0x50] sm:$0xff] %v689
          %709 = vst [vmem:[%s702 + $0x68] sm:$0xff] %v690
          %710 = vst [vmem:[%s702 + $0x70] sm:$0xff] %v691
          %711 = vst [vmem:[%s702 + $0x88] sm:$0xff] %v692
          %712 = vst [vmem:[%s702 + $0x90] sm:$0xff] %v693
          %713 = vst [vmem:[%s702 + $0xa8] sm:$0xff] %v694
          %714 = vst [vmem:[%s702 + $0xb0] sm:$0xff] %v695
          %715 = vst [vmem:[%s702 + $0xc8] sm:$0xff] %v696
          %716 = vst [vmem:[%s702 + $0xd0] sm:$0xff] %v697
          %717 = vst [vmem:[%s702 + $0xe8] sm:$0xff] %v698
          %718 = vst [vmem:[%s702 + $0xf0] sm:$0xff] %v699
        $region65: #{tpu_custom_call.1} parent=47 // loop_footer
          %s503 = sadd.s32 1, %s499
        $region66: #{tpu_custom_call.1} parent=47 // loop_footer_branch
          %498 = sbr.rel target = $region62
        $region67: #{tpu_custom_call.1} parent=47 // loop_exit
          _
        %719 = vst [vmem:[%s444] sm:$0x1] 0.0
        %s720 = scalar_lea.vmem [#allocation2], 7
        %v721 = vld [vmem:[%s720] ss:$2 sm:$0xff]
        %s722 = scalar_lea.vmem [#allocation2], 71
        %v723 = vld [vmem:[%s722] ss:$2 sm:$0xff]
        %s724 = scalar_lea.vmem [#allocation2], 135
        %v725 = vld [vmem:[%s724] ss:$2 sm:$0xff]
        %s726 = scalar_lea.vmem [#allocation2], 199
        %v727 = vld [vmem:[%s726] ss:$2 sm:$0xff]
        %s728 = scalar_lea.vmem [#allocation2], 263
        %v729 = vld [vmem:[%s728] ss:$2 sm:$0xff]
        %s730 = scalar_lea.vmem [#allocation2], 327
        %v731 = vld [vmem:[%s730] ss:$2 sm:$0xff]
        %s732 = scalar_lea.vmem [#allocation2], 391
        %v733 = vld [vmem:[%s732] ss:$2 sm:$0xff]
        %s734 = scalar_lea.vmem [#allocation2], 455
        %v735 = vld [vmem:[%s734] ss:$2 sm:$0xff]
        %v736 = vpack.c.bf16 %v723, %v721
        %v737 = vpack.c.bf16 %v727, %v725
        %v738 = vpack.c.bf16 %v731, %v729
        %v739 = vpack.c.bf16 %v735, %v733
        %v740 = vld [vmem:[#allocation8] sm:$0xf]
        %v741 = vld [vmem:[#allocation8 + $0x4] sm:$0xf]
        %v742 = vld [vmem:[#allocation8 + $0x8] sm:$0xf]
        %v743 = vld [vmem:[#allocation8 + $0xc] sm:$0xf]
        %v744 = vld [vmem:[#allocation8 + $0x10] sm:$0xf]
        %v745 = vld [vmem:[#allocation8 + $0x14] sm:$0xf]
        %v746 = vld [vmem:[#allocation8 + $0x18] sm:$0xf]
        %v747 = vld [vmem:[#allocation8 + $0x1c] sm:$0xf]
        %v748 = vld [vmem:[#allocation8 + $0x20] sm:$0xf]
        %v749 = vld [vmem:[#allocation8 + $0x24] sm:$0xf]
        %v750 = vld [vmem:[#allocation8 + $0x28] sm:$0xf]
        %v751 = vld [vmem:[#allocation8 + $0x2c] sm:$0xf]
        %v752 = vld [vmem:[#allocation8 + $0x30] sm:$0xf]
        %v753 = vld [vmem:[#allocation8 + $0x34] sm:$0xf]
        %v754 = vld [vmem:[#allocation8 + $0x38] sm:$0xf]
        %v755 = vld [vmem:[#allocation8 + $0x3c] sm:$0xf]
        %s756 = scalar_lea.vmem [#allocation2], 8
        %v757 = vld [vmem:[%s756] ss:$2 sm:$0xff]
        %s758 = scalar_lea.vmem [#allocation2], 72
        %v759 = vld [vmem:[%s758] ss:$2 sm:$0xff]
        %s760 = scalar_lea.vmem [#allocation2], 136
        %v761 = vld [vmem:[%s760] ss:$2 sm:$0xff]
        %s762 = scalar_lea.vmem [#allocation2], 200
        %v763 = vld [vmem:[%s762] ss:$2 sm:$0xff]
        %s764 = scalar_lea.vmem [#allocation2], 264
        %v765 = vld [vmem:[%s764] ss:$2 sm:$0xff]
        %s766 = scalar_lea.vmem [#allocation2], 328
        %v767 = vld [vmem:[%s766] ss:$2 sm:$0xff]
        %s768 = scalar_lea.vmem [#allocation2], 392
        %v769 = vld [vmem:[%s768] ss:$2 sm:$0xff]
        %s770 = scalar_lea.vmem [#allocation2], 456
        %v771 = vld [vmem:[%s770] ss:$2 sm:$0xff]
        %v772 = vpack.c.bf16 %v759, %v757
        %v773 = vpack.c.bf16 %v763, %v761
        %v774 = vpack.c.bf16 %v767, %v765
        %v775 = vpack.c.bf16 %v771, %v769
        %s776 = scalar_lea.vmem [#allocation8], 64
        %v777 = vld [vmem:[%s776] sm:$0xf]
        %v778 = vld [vmem:[%s776 + $0x4] sm:$0xf]
        %v779 = vld [vmem:[%s776 + $0x8] sm:$0xf]
        %v780 = vld [vmem:[%s776 + $0xc] sm:$0xf]
        %v781 = vld [vmem:[%s776 + $0x10] sm:$0xf]
        %v782 = vld [vmem:[%s776 + $0x14] sm:$0xf]
        %v783 = vld [vmem:[%s776 + $0x18] sm:$0xf]
        %v784 = vld [vmem:[%s776 + $0x1c] sm:$0xf]
        %v785 = vld [vmem:[%s776 + $0x20] sm:$0xf]
        %v786 = vld [vmem:[%s776 + $0x24] sm:$0xf]
        %v787 = vld [vmem:[%s776 + $0x28] sm:$0xf]
        %v788 = vld [vmem:[%s776 + $0x2c] sm:$0xf]
        %v789 = vld [vmem:[%s776 + $0x30] sm:$0xf]
        %v790 = vld [vmem:[%s776 + $0x34] sm:$0xf]
        %v791 = vld [vmem:[%s776 + $0x38] sm:$0xf]
        %v792 = vld [vmem:[%s776 + $0x3c] sm:$0xf]
        %v809 = vunpack.c.l.b16 %v777
        %v810 = vunpack.c.l.b16 %v778
        %v811 = vunpack.c.l.b16 %v779
        %v812 = vunpack.c.l.b16 %v780
        %v813 = vunpack.c.l.b16 %v781
        %v814 = vunpack.c.l.b16 %v782
        %v815 = vunpack.c.l.b16 %v783
        %v816 = vunpack.c.l.b16 %v784
        %v817 = vunpack.c.l.b16 %v785
        %v818 = vunpack.c.l.b16 %v786
        %v819 = vunpack.c.l.b16 %v787
        %v820 = vunpack.c.l.b16 %v788
        %v821 = vunpack.c.l.b16 %v789
        %v822 = vunpack.c.l.b16 %v790
        %v823 = vunpack.c.l.b16 %v791
        %v824 = vunpack.c.l.b16 %v792
        %v825 = vpack.c.b16 %v810, %v809
        %v826 = vpack.c.b16 %v812, %v811
        %v827 = vpack.c.b16 %v814, %v813
        %v828 = vpack.c.b16 %v816, %v815
        %v829 = vpack.c.b16 %v818, %v817
        %v830 = vpack.c.b16 %v820, %v819
        %v831 = vpack.c.b16 %v822, %v821
        %v832 = vpack.c.b16 %v824, %v823
        %841 = vmatpush.bf16.msra.mxu0 %v832
        %842 = vmatpush.bf16.msra.mxu0 %v831
        %843 = vmatpush.bf16.msra.mxu0 %v830
        %844 = vmatpush.bf16.msra.mxu0 %v829
        %845 = vmatpush.bf16.msra.mxu0 %v828
        %846 = vmatpush.bf16.msra.mxu0 %v827
        %847 = vmatpush.bf16.msra.mxu0 %v826
        %848 = vmatpush.bf16.msra.mxu0 %v825
        %849 = vmatmul.bf16.gmra.mxu0 %v772
        %v850 = vpop.f32.mrf.mxu0
        %v851 = vadd.f32 0.0, %v850
        %v852 = vpop.f32.mrf.mxu0
        %v853 = vadd.f32 0.0, %v852
        %854 = vmatmul.bf16.gmra.mxu0 %v773
        %v855 = vpop.f32.mrf.mxu0
        %v856 = vadd.f32 0.0, %v855
        %v857 = vpop.f32.mrf.mxu0
        %v858 = vadd.f32 0.0, %v857
        %859 = vmatmul.bf16.gmra.mxu0 %v774
        %v860 = vpop.f32.mrf.mxu0
        %v861 = vadd.f32 0.0, %v860
        %v862 = vpop.f32.mrf.mxu0
        %v863 = vadd.f32 0.0, %v862
        %864 = vmatmul.bf16.gmra.mxu0 %v775
        %v865 = vpop.f32.mrf.mxu0
        %v866 = vadd.f32 0.0, %v865
        %v867 = vpop.f32.mrf.mxu0
        %v868 = vadd.f32 0.0, %v867
        %869 = vdwg.mxu0
        %v886 = vunpack.c.l.b16 %v740
        %v887 = vunpack.c.l.b16 %v741
        %v888 = vunpack.c.l.b16 %v742
        %v889 = vunpack.c.l.b16 %v743
        %v890 = vunpack.c.l.b16 %v744
        %v891 = vunpack.c.l.b16 %v745
        %v892 = vunpack.c.l.b16 %v746
        %v893 = vunpack.c.l.b16 %v747
        %v894 = vunpack.c.l.b16 %v748
        %v895 = vunpack.c.l.b16 %v749
        %v896 = vunpack.c.l.b16 %v750
        %v897 = vunpack.c.l.b16 %v751
        %v898 = vunpack.c.l.b16 %v752
        %v899 = vunpack.c.l.b16 %v753
        %v900 = vunpack.c.l.b16 %v754
        %v901 = vunpack.c.l.b16 %v755
        %v902 = vpack.c.b16 %v887, %v886
        %v903 = vpack.c.b16 %v889, %v888
        %v904 = vpack.c.b16 %v891, %v890
        %v905 = vpack.c.b16 %v893, %v892
        %v906 = vpack.c.b16 %v895, %v894
        %v907 = vpack.c.b16 %v897, %v896
        %v908 = vpack.c.b16 %v899, %v898
        %v909 = vpack.c.b16 %v901, %v900
        %918 = vmatpush.bf16.msra.mxu0 %v909
        %919 = vmatpush.bf16.msra.mxu0 %v908
        %920 = vmatpush.bf16.msra.mxu0 %v907
        %921 = vmatpush.bf16.msra.mxu0 %v906
        %922 = vmatpush.bf16.msra.mxu0 %v905
        %923 = vmatpush.bf16.msra.mxu0 %v904
        %924 = vmatpush.bf16.msra.mxu0 %v903
        %925 = vmatpush.bf16.msra.mxu0 %v902
        %926 = vmatmul.bf16.gmra.mxu0 %v736
        %v927 = vpop.f32.mrf.mxu0
        %v928 = vadd.f32 %v851, %v927
        %v929 = vpop.f32.mrf.mxu0
        %v930 = vadd.f32 %v853, %v929
        %931 = vmatmul.bf16.gmra.mxu0 %v737
        %v932 = vpop.f32.mrf.mxu0
        %v933 = vadd.f32 %v856, %v932
        %v934 = vpop.f32.mrf.mxu0
        %v935 = vadd.f32 %v858, %v934
        %936 = vmatmul.bf16.gmra.mxu0 %v738
        %v937 = vpop.f32.mrf.mxu0
        %v938 = vadd.f32 %v861, %v937
        %v939 = vpop.f32.mrf.mxu0
        %v940 = vadd.f32 %v863, %v939
        %941 = vmatmul.bf16.gmra.mxu0 %v739
        %v942 = vpop.f32.mrf.mxu0
        %v943 = vadd.f32 %v866, %v942
        %v944 = vpop.f32.mrf.mxu0
        %v945 = vadd.f32 %v868, %v944
        %946 = vdwg.mxu0
        %s947 = scalar_lea.vmem [#allocation2], 9
        %v948 = vld [vmem:[%s947] ss:$2 sm:$0xff]
        %s949 = scalar_lea.vmem [#allocation2], 73
        %v950 = vld [vmem:[%s949] ss:$2 sm:$0xff]
        %s951 = scalar_lea.vmem [#allocation2], 137
        %v952 = vld [vmem:[%s951] ss:$2 sm:$0xff]
        %s953 = scalar_lea.vmem [#allocation2], 201
        %v954 = vld [vmem:[%s953] ss:$2 sm:$0xff]
        %s955 = scalar_lea.vmem [#allocation2], 265
        %v956 = vld [vmem:[%s955] ss:$2 sm:$0xff]
        %s957 = scalar_lea.vmem [#allocation2], 329
        %v958 = vld [vmem:[%s957] ss:$2 sm:$0xff]
        %s959 = scalar_lea.vmem [#allocation2], 393
        %v960 = vld [vmem:[%s959] ss:$2 sm:$0xff]
        %s961 = scalar_lea.vmem [#allocation2], 457
        %v962 = vld [vmem:[%s961] ss:$2 sm:$0xff]
        %v963 = vpack.c.bf16 %v950, %v948
        %v964 = vpack.c.bf16 %v954, %v952
        %v965 = vpack.c.bf16 %v958, %v956
        %v966 = vpack.c.bf16 %v962, %v960
        %s967 = scalar_lea.vmem [#allocation8], 128
        %v968 = vld [vmem:[%s967] sm:$0xf]
        %v969 = vld [vmem:[%s967 + $0x4] sm:$0xf]
        %v970 = vld [vmem:[%s967 + $0x8] sm:$0xf]
        %v971 = vld [vmem:[%s967 + $0xc] sm:$0xf]
        %v972 = vld [vmem:[%s967 + $0x10] sm:$0xf]
        %v973 = vld [vmem:[%s967 + $0x14] sm:$0xf]
        %v974 = vld [vmem:[%s967 + $0x18] sm:$0xf]
        %v975 = vld [vmem:[%s967 + $0x1c] sm:$0xf]
        %v976 = vld [vmem:[%s967 + $0x20] sm:$0xf]
        %v977 = vld [vmem:[%s967 + $0x24] sm:$0xf]
        %v978 = vld [vmem:[%s967 + $0x28] sm:$0xf]
        %v979 = vld [vmem:[%s967 + $0x2c] sm:$0xf]
        %v980 = vld [vmem:[%s967 + $0x30] sm:$0xf]
        %v981 = vld [vmem:[%s967 + $0x34] sm:$0xf]
        %v982 = vld [vmem:[%s967 + $0x38] sm:$0xf]
        %v983 = vld [vmem:[%s967 + $0x3c] sm:$0xf]
        %v1000 = vunpack.c.l.b16 %v968
        %v1001 = vunpack.c.l.b16 %v969
        %v1002 = vunpack.c.l.b16 %v970
        %v1003 = vunpack.c.l.b16 %v971
        %v1004 = vunpack.c.l.b16 %v972
        %v1005 = vunpack.c.l.b16 %v973
        %v1006 = vunpack.c.l.b16 %v974
        %v1007 = vunpack.c.l.b16 %v975
        %v1008 = vunpack.c.l.b16 %v976
        %v1009 = vunpack.c.l.b16 %v977
        %v1010 = vunpack.c.l.b16 %v978
        %v1011 = vunpack.c.l.b16 %v979
        %v1012 = vunpack.c.l.b16 %v980
        %v1013 = vunpack.c.l.b16 %v981
        %v1014 = vunpack.c.l.b16 %v982
        %v1015 = vunpack.c.l.b16 %v983
        %v1016 = vpack.c.b16 %v1001, %v1000
        %v1017 = vpack.c.b16 %v1003, %v1002
        %v1018 = vpack.c.b16 %v1005, %v1004
        %v1019 = vpack.c.b16 %v1007, %v1006
        %v1020 = vpack.c.b16 %v1009, %v1008
        %v1021 = vpack.c.b16 %v1011, %v1010
        %v1022 = vpack.c.b16 %v1013, %v1012
        %v1023 = vpack.c.b16 %v1015, %v1014
        %1032 = vmatpush.bf16.msra.mxu0 %v1023
        %1033 = vmatpush.bf16.msra.mxu0 %v1022
        %1034 = vmatpush.bf16.msra.mxu0 %v1021
        %1035 = vmatpush.bf16.msra.mxu0 %v1020
        %1036 = vmatpush.bf16.msra.mxu0 %v1019
        %1037 = vmatpush.bf16.msra.mxu0 %v1018
        %1038 = vmatpush.bf16.msra.mxu0 %v1017
        %1039 = vmatpush.bf16.msra.mxu0 %v1016
        %1040 = vmatmul.bf16.gmra.mxu0 %v963
        %v1041 = vpop.f32.mrf.mxu0
        %v1042 = vadd.f32 0.0, %v1041
        %v1043 = vpop.f32.mrf.mxu0
        %v1044 = vadd.f32 0.0, %v1043
        %1045 = vmatmul.bf16.gmra.mxu0 %v964
        %v1046 = vpop.f32.mrf.mxu0
        %v1047 = vadd.f32 0.0, %v1046
        %v1048 = vpop.f32.mrf.mxu0
        %v1049 = vadd.f32 0.0, %v1048
        %1050 = vmatmul.bf16.gmra.mxu0 %v965
        %v1051 = vpop.f32.mrf.mxu0
        %v1052 = vadd.f32 0.0, %v1051
        %v1053 = vpop.f32.mrf.mxu0
        %v1054 = vadd.f32 0.0, %v1053
        %1055 = vmatmul.bf16.gmra.mxu0 %v966
        %v1056 = vpop.f32.mrf.mxu0
        %v1057 = vadd.f32 0.0, %v1056
        %v1058 = vpop.f32.mrf.mxu0
        %v1059 = vadd.f32 0.0, %v1058
        %1060 = vdwg.mxu0
        %v1061 = vadd.f32 %v928, %v1042
        %v1062 = vadd.f32 %v930, %v1044
        %v1063 = vadd.f32 %v933, %v1047
        %v1064 = vadd.f32 %v935, %v1049
        %v1065 = vadd.f32 %v938, %v1052
        %v1066 = vadd.f32 %v940, %v1054
        %v1067 = vadd.f32 %v943, %v1057
        %v1068 = vadd.f32 %v945, %v1059
        %s1069 = scalar_lea.vmem [#allocation2], 32
        %s1070 = scalar_lea.vmem %s1069, 7 [#allocation2]
        %v1071 = vld [vmem:[%s1070] ss:$2 sm:$0xff]
        %s1072 = scalar_lea.vmem %s1069, 71 [#allocation2]
        %v1073 = vld [vmem:[%s1072] ss:$2 sm:$0xff]
        %s1074 = scalar_lea.vmem %s1069, 135 [#allocation2]
        %v1075 = vld [vmem:[%s1074] ss:$2 sm:$0xff]
        %s1076 = scalar_lea.vmem %s1069, 199 [#allocation2]
        %v1077 = vld [vmem:[%s1076] ss:$2 sm:$0xff]
        %s1078 = scalar_lea.vmem %s1069, 263 [#allocation2]
        %v1079 = vld [vmem:[%s1078] ss:$2 sm:$0xff]
        %s1080 = scalar_lea.vmem %s1069, 327 [#allocation2]
        %v1081 = vld [vmem:[%s1080] ss:$2 sm:$0xff]
        %s1082 = scalar_lea.vmem %s1069, 391 [#allocation2]
        %v1083 = vld [vmem:[%s1082] ss:$2 sm:$0xff]
        %s1084 = scalar_lea.vmem %s1069, 455 [#allocation2]
        %v1085 = vld [vmem:[%s1084] ss:$2 sm:$0xff]
        %v1086 = vpack.c.bf16 %v1073, %v1071
        %v1087 = vpack.c.bf16 %v1077, %v1075
        %v1088 = vpack.c.bf16 %v1081, %v1079
        %v1089 = vpack.c.bf16 %v1085, %v1083
        %s1090 = scalar_lea.vmem [#allocation8], 192
        %v1091 = vld [vmem:[%s1090] sm:$0xf]
        %v1092 = vld [vmem:[%s1090 + $0x4] sm:$0xf]
        %v1093 = vld [vmem:[%s1090 + $0x8] sm:$0xf]
        %v1094 = vld [vmem:[%s1090 + $0xc] sm:$0xf]
        %v1095 = vld [vmem:[%s1090 + $0x10] sm:$0xf]
        %v1096 = vld [vmem:[%s1090 + $0x14] sm:$0xf]
        %v1097 = vld [vmem:[%s1090 + $0x18] sm:$0xf]
        %v1098 = vld [vmem:[%s1090 + $0x1c] sm:$0xf]
        %v1099 = vld [vmem:[%s1090 + $0x20] sm:$0xf]
        %v1100 = vld [vmem:[%s1090 + $0x24] sm:$0xf]
        %v1101 = vld [vmem:[%s1090 + $0x28] sm:$0xf]
        %v1102 = vld [vmem:[%s1090 + $0x2c] sm:$0xf]
        %v1103 = vld [vmem:[%s1090 + $0x30] sm:$0xf]
        %v1104 = vld [vmem:[%s1090 + $0x34] sm:$0xf]
        %v1105 = vld [vmem:[%s1090 + $0x38] sm:$0xf]
        %v1106 = vld [vmem:[%s1090 + $0x3c] sm:$0xf]
        %v1123 = vunpack.c.l.b16 %v1091
        %v1124 = vunpack.c.l.b16 %v1092
        %v1125 = vunpack.c.l.b16 %v1093
        %v1126 = vunpack.c.l.b16 %v1094
        %v1127 = vunpack.c.l.b16 %v1095
        %v1128 = vunpack.c.l.b16 %v1096
        %v1129 = vunpack.c.l.b16 %v1097
        %v1130 = vunpack.c.l.b16 %v1098
        %v1131 = vunpack.c.l.b16 %v1099
        %v1132 = vunpack.c.l.b16 %v1100
        %v1133 = vunpack.c.l.b16 %v1101
        %v1134 = vunpack.c.l.b16 %v1102
        %v1135 = vunpack.c.l.b16 %v1103
        %v1136 = vunpack.c.l.b16 %v1104
        %v1137 = vunpack.c.l.b16 %v1105
        %v1138 = vunpack.c.l.b16 %v1106
        %v1139 = vpack.c.b16 %v1124, %v1123
        %v1140 = vpack.c.b16 %v1126, %v1125
        %v1141 = vpack.c.b16 %v1128, %v1127
        %v1142 = vpack.c.b16 %v1130, %v1129
        %v1143 = vpack.c.b16 %v1132, %v1131
        %v1144 = vpack.c.b16 %v1134, %v1133
        %v1145 = vpack.c.b16 %v1136, %v1135
        %v1146 = vpack.c.b16 %v1138, %v1137
        %1155 = vmatpush.bf16.msra.mxu0 %v1146
        %1156 = vmatpush.bf16.msra.mxu0 %v1145
        %1157 = vmatpush.bf16.msra.mxu0 %v1144
        %1158 = vmatpush.bf16.msra.mxu0 %v1143
        %1159 = vmatpush.bf16.msra.mxu0 %v1142
        %1160 = vmatpush.bf16.msra.mxu0 %v1141
        %1161 = vmatpush.bf16.msra.mxu0 %v1140
        %1162 = vmatpush.bf16.msra.mxu0 %v1139
        %1163 = vmatmul.bf16.gmra.mxu0 %v1086
        %v1164 = vpop.f32.mrf.mxu0
        %v1165 = vadd.f32 0.0, %v1164
        %v1166 = vpop.f32.mrf.mxu0
        %v1167 = vadd.f32 0.0, %v1166
        %1168 = vmatmul.bf16.gmra.mxu0 %v1087
        %v1169 = vpop.f32.mrf.mxu0
        %v1170 = vadd.f32 0.0, %v1169
        %v1171 = vpop.f32.mrf.mxu0
        %v1172 = vadd.f32 0.0, %v1171
        %1173 = vmatmul.bf16.gmra.mxu0 %v1088
        %v1174 = vpop.f32.mrf.mxu0
        %v1175 = vadd.f32 0.0, %v1174
        %v1176 = vpop.f32.mrf.mxu0
        %v1177 = vadd.f32 0.0, %v1176
        %1178 = vmatmul.bf16.gmra.mxu0 %v1089
        %v1179 = vpop.f32.mrf.mxu0
        %v1180 = vadd.f32 0.0, %v1179
        %v1181 = vpop.f32.mrf.mxu0
        %v1182 = vadd.f32 0.0, %v1181
        %1183 = vdwg.mxu0
        %v1184 = vadd.f32 %v1061, %v1165
        %v1185 = vadd.f32 %v1062, %v1167
        %v1186 = vadd.f32 %v1063, %v1170
        %v1187 = vadd.f32 %v1064, %v1172
        %v1188 = vadd.f32 %v1065, %v1175
        %v1189 = vadd.f32 %v1066, %v1177
        %v1190 = vadd.f32 %v1067, %v1180
        %v1191 = vadd.f32 %v1068, %v1182
        %s1192 = scalar_lea.vmem %s1069, 8 [#allocation2]
        %v1193 = vld [vmem:[%s1192] ss:$2 sm:$0xff]
        %s1194 = scalar_lea.vmem %s1069, 72 [#allocation2]
        %v1195 = vld [vmem:[%s1194] ss:$2 sm:$0xff]
        %s1196 = scalar_lea.vmem %s1069, 136 [#allocation2]
        %v1197 = vld [vmem:[%s1196] ss:$2 sm:$0xff]
        %s1198 = scalar_lea.vmem %s1069, 200 [#allocation2]
        %v1199 = vld [vmem:[%s1198] ss:$2 sm:$0xff]
        %s1200 = scalar_lea.vmem %s1069, 264 [#allocation2]
        %v1201 = vld [vmem:[%s1200] ss:$2 sm:$0xff]
        %s1202 = scalar_lea.vmem %s1069, 328 [#allocation2]
        %v1203 = vld [vmem:[%s1202] ss:$2 sm:$0xff]
        %s1204 = scalar_lea.vmem %s1069, 392 [#allocation2]
        %v1205 = vld [vmem:[%s1204] ss:$2 sm:$0xff]
        %s1206 = scalar_lea.vmem %s1069, 456 [#allocation2]
        %v1207 = vld [vmem:[%s1206] ss:$2 sm:$0xff]
        %v1208 = vpack.c.bf16 %v1195, %v1193
        %v1209 = vpack.c.bf16 %v1199, %v1197
        %v1210 = vpack.c.bf16 %v1203, %v1201
        %v1211 = vpack.c.bf16 %v1207, %v1205
        %s1212 = scalar_lea.vmem [#allocation8], 256
        %v1213 = vld [vmem:[%s1212] sm:$0xf]
        %v1214 = vld [vmem:[%s1212 + $0x4] sm:$0xf]
        %v1215 = vld [vmem:[%s1212 + $0x8] sm:$0xf]
        %v1216 = vld [vmem:[%s1212 + $0xc] sm:$0xf]
        %v1217 = vld [vmem:[%s1212 + $0x10] sm:$0xf]
        %v1218 = vld [vmem:[%s1212 + $0x14] sm:$0xf]
        %v1219 = vld [vmem:[%s1212 + $0x18] sm:$0xf]
        %v1220 = vld [vmem:[%s1212 + $0x1c] sm:$0xf]
        %v1221 = vld [vmem:[%s1212 + $0x20] sm:$0xf]
        %v1222 = vld [vmem:[%s1212 + $0x24] sm:$0xf]
        %v1223 = vld [vmem:[%s1212 + $0x28] sm:$0xf]
        %v1224 = vld [vmem:[%s1212 + $0x2c] sm:$0xf]
        %v1225 = vld [vmem:[%s1212 + $0x30] sm:$0xf]
        %v1226 = vld [vmem:[%s1212 + $0x34] sm:$0xf]
        %v1227 = vld [vmem:[%s1212 + $0x38] sm:$0xf]
        %v1228 = vld [vmem:[%s1212 + $0x3c] sm:$0xf]
        %v1245 = vunpack.c.l.b16 %v1213
        %v1246 = vunpack.c.l.b16 %v1214
        %v1247 = vunpack.c.l.b16 %v1215
        %v1248 = vunpack.c.l.b16 %v1216
        %v1249 = vunpack.c.l.b16 %v1217
        %v1250 = vunpack.c.l.b16 %v1218
        %v1251 = vunpack.c.l.b16 %v1219
        %v1252 = vunpack.c.l.b16 %v1220
        %v1253 = vunpack.c.l.b16 %v1221
        %v1254 = vunpack.c.l.b16 %v1222
        %v1255 = vunpack.c.l.b16 %v1223
        %v1256 = vunpack.c.l.b16 %v1224
        %v1257 = vunpack.c.l.b16 %v1225
        %v1258 = vunpack.c.l.b16 %v1226
        %v1259 = vunpack.c.l.b16 %v1227
        %v1260 = vunpack.c.l.b16 %v1228
        %v1261 = vpack.c.b16 %v1246, %v1245
        %v1262 = vpack.c.b16 %v1248, %v1247
        %v1263 = vpack.c.b16 %v1250, %v1249
        %v1264 = vpack.c.b16 %v1252, %v1251
        %v1265 = vpack.c.b16 %v1254, %v1253
        %v1266 = vpack.c.b16 %v1256, %v1255
        %v1267 = vpack.c.b16 %v1258, %v1257
        %v1268 = vpack.c.b16 %v1260, %v1259
        %1277 = vmatpush.bf16.msra.mxu0 %v1268
        %1278 = vmatpush.bf16.msra.mxu0 %v1267
        %1279 = vmatpush.bf16.msra.mxu0 %v1266
        %1280 = vmatpush.bf16.msra.mxu0 %v1265
        %1281 = vmatpush.bf16.msra.mxu0 %v1264
        %1282 = vmatpush.bf16.msra.mxu0 %v1263
        %1283 = vmatpush.bf16.msra.mxu0 %v1262
        %1284 = vmatpush.bf16.msra.mxu0 %v1261
        %1285 = vmatmul.bf16.gmra.mxu0 %v1208
        %v1286 = vpop.f32.mrf.mxu0
        %v1287 = vadd.f32 0.0, %v1286
        %v1288 = vpop.f32.mrf.mxu0
        %v1289 = vadd.f32 0.0, %v1288
        %1290 = vmatmul.bf16.gmra.mxu0 %v1209
        %v1291 = vpop.f32.mrf.mxu0
        %v1292 = vadd.f32 0.0, %v1291
        %v1293 = vpop.f32.mrf.mxu0
        %v1294 = vadd.f32 0.0, %v1293
        %1295 = vmatmul.bf16.gmra.mxu0 %v1210
        %v1296 = vpop.f32.mrf.mxu0
        %v1297 = vadd.f32 0.0, %v1296
        %v1298 = vpop.f32.mrf.mxu0
        %v1299 = vadd.f32 0.0, %v1298
        %1300 = vmatmul.bf16.gmra.mxu0 %v1211
        %v1301 = vpop.f32.mrf.mxu0
        %v1302 = vadd.f32 0.0, %v1301
        %v1303 = vpop.f32.mrf.mxu0
        %v1304 = vadd.f32 0.0, %v1303
        %1305 = vdwg.mxu0
        %v1306 = vadd.f32 %v1184, %v1287
        %v1307 = vadd.f32 %v1185, %v1289
        %v1308 = vadd.f32 %v1186, %v1292
        %v1309 = vadd.f32 %v1187, %v1294
        %v1310 = vadd.f32 %v1188, %v1297
        %v1311 = vadd.f32 %v1189, %v1299
        %v1312 = vadd.f32 %v1190, %v1302
        %v1313 = vadd.f32 %v1191, %v1304
        %s1314 = scalar_lea.vmem %s1069, 9 [#allocation2]
        %v1315 = vld [vmem:[%s1314] ss:$2 sm:$0xff]
        %s1316 = scalar_lea.vmem %s1069, 73 [#allocation2]
        %v1317 = vld [vmem:[%s1316] ss:$2 sm:$0xff]
        %s1318 = scalar_lea.vmem %s1069, 137 [#allocation2]
        %v1319 = vld [vmem:[%s1318] ss:$2 sm:$0xff]
        %s1320 = scalar_lea.vmem %s1069, 201 [#allocation2]
        %v1321 = vld [vmem:[%s1320] ss:$2 sm:$0xff]
        %s1322 = scalar_lea.vmem %s1069, 265 [#allocation2]
        %v1323 = vld [vmem:[%s1322] ss:$2 sm:$0xff]
        %s1324 = scalar_lea.vmem %s1069, 329 [#allocation2]
        %v1325 = vld [vmem:[%s1324] ss:$2 sm:$0xff]
        %s1326 = scalar_lea.vmem %s1069, 393 [#allocation2]
        %v1327 = vld [vmem:[%s1326] ss:$2 sm:$0xff]
        %s1328 = scalar_lea.vmem %s1069, 457 [#allocation2]
        %v1329 = vld [vmem:[%s1328] ss:$2 sm:$0xff]
        %v1330 = vpack.c.bf16 %v1317, %v1315
        %v1331 = vpack.c.bf16 %v1321, %v1319
        %v1332 = vpack.c.bf16 %v1325, %v1323
        %v1333 = vpack.c.bf16 %v1329, %v1327
        %s1334 = scalar_lea.vmem [#allocation8], 320
        %v1335 = vld [vmem:[%s1334] sm:$0xf]
        %v1336 = vld [vmem:[%s1334 + $0x4] sm:$0xf]
        %v1337 = vld [vmem:[%s1334 + $0x8] sm:$0xf]
        %v1338 = vld [vmem:[%s1334 + $0xc] sm:$0xf]
        %v1339 = vld [vmem:[%s1334 + $0x10] sm:$0xf]
        %v1340 = vld [vmem:[%s1334 + $0x14] sm:$0xf]
        %v1341 = vld [vmem:[%s1334 + $0x18] sm:$0xf]
        %v1342 = vld [vmem:[%s1334 + $0x1c] sm:$0xf]
        %v1343 = vld [vmem:[%s1334 + $0x20] sm:$0xf]
        %v1344 = vld [vmem:[%s1334 + $0x24] sm:$0xf]
        %v1345 = vld [vmem:[%s1334 + $0x28] sm:$0xf]
        %v1346 = vld [vmem:[%s1334 + $0x2c] sm:$0xf]
        %v1347 = vld [vmem:[%s1334 + $0x30] sm:$0xf]
        %v1348 = vld [vmem:[%s1334 + $0x34] sm:$0xf]
        %v1349 = vld [vmem:[%s1334 + $0x38] sm:$0xf]
        %v1350 = vld [vmem:[%s1334 + $0x3c] sm:$0xf]
        %v1367 = vunpack.c.l.b16 %v1335
        %v1368 = vunpack.c.l.b16 %v1336
        %v1369 = vunpack.c.l.b16 %v1337
        %v1370 = vunpack.c.l.b16 %v1338
        %v1371 = vunpack.c.l.b16 %v1339
        %v1372 = vunpack.c.l.b16 %v1340
        %v1373 = vunpack.c.l.b16 %v1341
        %v1374 = vunpack.c.l.b16 %v1342
        %v1375 = vunpack.c.l.b16 %v1343
        %v1376 = vunpack.c.l.b16 %v1344
        %v1377 = vunpack.c.l.b16 %v1345
        %v1378 = vunpack.c.l.b16 %v1346
        %v1379 = vunpack.c.l.b16 %v1347
        %v1380 = vunpack.c.l.b16 %v1348
        %v1381 = vunpack.c.l.b16 %v1349
        %v1382 = vunpack.c.l.b16 %v1350
        %v1383 = vpack.c.b16 %v1368, %v1367
        %v1384 = vpack.c.b16 %v1370, %v1369
        %v1385 = vpack.c.b16 %v1372, %v1371
        %v1386 = vpack.c.b16 %v1374, %v1373
        %v1387 = vpack.c.b16 %v1376, %v1375
        %v1388 = vpack.c.b16 %v1378, %v1377
        %v1389 = vpack.c.b16 %v1380, %v1379
        %v1390 = vpack.c.b16 %v1382, %v1381
        %1399 = vmatpush.bf16.msra.mxu0 %v1390
        %1400 = vmatpush.bf16.msra.mxu0 %v1389
        %1401 = vmatpush.bf16.msra.mxu0 %v1388
        %1402 = vmatpush.bf16.msra.mxu0 %v1387
        %1403 = vmatpush.bf16.msra.mxu0 %v1386
        %1404 = vmatpush.bf16.msra.mxu0 %v1385
        %1405 = vmatpush.bf16.msra.mxu0 %v1384
        %1406 = vmatpush.bf16.msra.mxu0 %v1383
        %1407 = vmatmul.bf16.gmra.mxu0 %v1330
        %v1408 = vpop.f32.mrf.mxu0
        %v1409 = vadd.f32 0.0, %v1408
        %v1410 = vpop.f32.mrf.mxu0
        %v1411 = vadd.f32 0.0, %v1410
        %1412 = vmatmul.bf16.gmra.mxu0 %v1331
        %v1413 = vpop.f32.mrf.mxu0
        %v1414 = vadd.f32 0.0, %v1413
        %v1415 = vpop.f32.mrf.mxu0
        %v1416 = vadd.f32 0.0, %v1415
        %1417 = vmatmul.bf16.gmra.mxu0 %v1332
        %v1418 = vpop.f32.mrf.mxu0
        %v1419 = vadd.f32 0.0, %v1418
        %v1420 = vpop.f32.mrf.mxu0
        %v1421 = vadd.f32 0.0, %v1420
        %1422 = vmatmul.bf16.gmra.mxu0 %v1333
        %v1423 = vpop.f32.mrf.mxu0
        %v1424 = vadd.f32 0.0, %v1423
        %v1425 = vpop.f32.mrf.mxu0
        %v1426 = vadd.f32 0.0, %v1425
        %1427 = vdwg.mxu0
        %v1428 = vadd.f32 %v1306, %v1409
        %v1429 = vadd.f32 %v1307, %v1411
        %v1430 = vadd.f32 %v1308, %v1414
        %v1431 = vadd.f32 %v1309, %v1416
        %v1432 = vadd.f32 %v1310, %v1419
        %v1433 = vadd.f32 %v1311, %v1421
        %v1434 = vadd.f32 %v1312, %v1424
        %v1435 = vadd.f32 %v1313, %v1426
        %s1436 = scalar_lea.vmem [#allocation2], 64
        %s1437 = scalar_lea.vmem %s1436, 7 [#allocation2]
        %v1438 = vld [vmem:[%s1437] ss:$2 sm:$0xff]
        %s1439 = scalar_lea.vmem %s1436, 71 [#allocation2]
        %v1440 = vld [vmem:[%s1439] ss:$2 sm:$0xff]
        %s1441 = scalar_lea.vmem %s1436, 135 [#allocation2]
        %v1442 = vld [vmem:[%s1441] ss:$2 sm:$0xff]
        %s1443 = scalar_lea.vmem %s1436, 199 [#allocation2]
        %v1444 = vld [vmem:[%s1443] ss:$2 sm:$0xff]
        %s1445 = scalar_lea.vmem %s1436, 263 [#allocation2]
        %v1446 = vld [vmem:[%s1445] ss:$2 sm:$0xff]
        %s1447 = scalar_lea.vmem %s1436, 327 [#allocation2]
        %v1448 = vld [vmem:[%s1447] ss:$2 sm:$0xff]
        %s1449 = scalar_lea.vmem %s1436, 391 [#allocation2]
        %v1450 = vld [vmem:[%s1449] ss:$2 sm:$0xff]
        %s1451 = scalar_lea.vmem %s1436, 455 [#allocation2]
        %v1452 = vld [vmem:[%s1451] ss:$2 sm:$0xff]
        %v1453 = vpack.c.bf16 %v1440, %v1438
        %v1454 = vpack.c.bf16 %v1444, %v1442
        %v1455 = vpack.c.bf16 %v1448, %v1446
        %v1456 = vpack.c.bf16 %v1452, %v1450
        %s1457 = scalar_lea.vmem [#allocation8], 384
        %v1458 = vld [vmem:[%s1457] sm:$0xf]
        %v1459 = vld [vmem:[%s1457 + $0x4] sm:$0xf]
        %v1460 = vld [vmem:[%s1457 + $0x8] sm:$0xf]
        %v1461 = vld [vmem:[%s1457 + $0xc] sm:$0xf]
        %v1462 = vld [vmem:[%s1457 + $0x10] sm:$0xf]
        %v1463 = vld [vmem:[%s1457 + $0x14] sm:$0xf]
        %v1464 = vld [vmem:[%s1457 + $0x18] sm:$0xf]
        %v1465 = vld [vmem:[%s1457 + $0x1c] sm:$0xf]
        %v1466 = vld [vmem:[%s1457 + $0x20] sm:$0xf]
        %v1467 = vld [vmem:[%s1457 + $0x24] sm:$0xf]
        %v1468 = vld [vmem:[%s1457 + $0x28] sm:$0xf]
        %v1469 = vld [vmem:[%s1457 + $0x2c] sm:$0xf]
        %v1470 = vld [vmem:[%s1457 + $0x30] sm:$0xf]
        %v1471 = vld [vmem:[%s1457 + $0x34] sm:$0xf]
        %v1472 = vld [vmem:[%s1457 + $0x38] sm:$0xf]
        %v1473 = vld [vmem:[%s1457 + $0x3c] sm:$0xf]
        %v1490 = vunpack.c.l.b16 %v1458
        %v1491 = vunpack.c.l.b16 %v1459
        %v1492 = vunpack.c.l.b16 %v1460
        %v1493 = vunpack.c.l.b16 %v1461
        %v1494 = vunpack.c.l.b16 %v1462
        %v1495 = vunpack.c.l.b16 %v1463
        %v1496 = vunpack.c.l.b16 %v1464
        %v1497 = vunpack.c.l.b16 %v1465
        %v1498 = vunpack.c.l.b16 %v1466
        %v1499 = vunpack.c.l.b16 %v1467
        %v1500 = vunpack.c.l.b16 %v1468
        %v1501 = vunpack.c.l.b16 %v1469
        %v1502 = vunpack.c.l.b16 %v1470
        %v1503 = vunpack.c.l.b16 %v1471
        %v1504 = vunpack.c.l.b16 %v1472
        %v1505 = vunpack.c.l.b16 %v1473
        %v1506 = vpack.c.b16 %v1491, %v1490
        %v1507 = vpack.c.b16 %v1493, %v1492
        %v1508 = vpack.c.b16 %v1495, %v1494
        %v1509 = vpack.c.b16 %v1497, %v1496
        %v1510 = vpack.c.b16 %v1499, %v1498
        %v1511 = vpack.c.b16 %v1501, %v1500
        %v1512 = vpack.c.b16 %v1503, %v1502
        %v1513 = vpack.c.b16 %v1505, %v1504
        %1522 = vmatpush.bf16.msra.mxu0 %v1513
        %1523 = vmatpush.bf16.msra.mxu0 %v1512
        %1524 = vmatpush.bf16.msra.mxu0 %v1511
        %1525 = vmatpush.bf16.msra.mxu0 %v1510
        %1526 = vmatpush.bf16.msra.mxu0 %v1509
        %1527 = vmatpush.bf16.msra.mxu0 %v1508
        %1528 = vmatpush.bf16.msra.mxu0 %v1507
        %1529 = vmatpush.bf16.msra.mxu0 %v1506
        %1530 = vmatmul.bf16.gmra.mxu0 %v1453
        %v1531 = vpop.f32.mrf.mxu0
        %v1532 = vadd.f32 0.0, %v1531
        %v1533 = vpop.f32.mrf.mxu0
        %v1534 = vadd.f32 0.0, %v1533
        %1535 = vmatmul.bf16.gmra.mxu0 %v1454
        %v1536 = vpop.f32.mrf.mxu0
        %v1537 = vadd.f32 0.0, %v1536
        %v1538 = vpop.f32.mrf.mxu0
        %v1539 = vadd.f32 0.0, %v1538
        %1540 = vmatmul.bf16.gmra.mxu0 %v1455
        %v1541 = vpop.f32.mrf.mxu0
        %v1542 = vadd.f32 0.0, %v1541
        %v1543 = vpop.f32.mrf.mxu0
        %v1544 = vadd.f32 0.0, %v1543
        %1545 = vmatmul.bf16.gmra.mxu0 %v1456
        %v1546 = vpop.f32.mrf.mxu0
        %v1547 = vadd.f32 0.0, %v1546
        %v1548 = vpop.f32.mrf.mxu0
        %v1549 = vadd.f32 0.0, %v1548
        %1550 = vdwg.mxu0
        %v1551 = vadd.f32 %v1428, %v1532
        %v1552 = vadd.f32 %v1429, %v1534
        %v1553 = vadd.f32 %v1430, %v1537
        %v1554 = vadd.f32 %v1431, %v1539
        %v1555 = vadd.f32 %v1432, %v1542
        %v1556 = vadd.f32 %v1433, %v1544
        %v1557 = vadd.f32 %v1434, %v1547
        %v1558 = vadd.f32 %v1435, %v1549
        %s1559 = scalar_lea.vmem %s1436, 8 [#allocation2]
        %v1560 = vld [vmem:[%s1559] ss:$2 sm:$0xff]
        %s1561 = scalar_lea.vmem %s1436, 72 [#allocation2]
        %v1562 = vld [vmem:[%s1561] ss:$2 sm:$0xff]
        %s1563 = scalar_lea.vmem %s1436, 136 [#allocation2]
        %v1564 = vld [vmem:[%s1563] ss:$2 sm:$0xff]
        %s1565 = scalar_lea.vmem %s1436, 200 [#allocation2]
        %v1566 = vld [vmem:[%s1565] ss:$2 sm:$0xff]
        %s1567 = scalar_lea.vmem %s1436, 264 [#allocation2]
        %v1568 = vld [vmem:[%s1567] ss:$2 sm:$0xff]
        %s1569 = scalar_lea.vmem %s1436, 328 [#allocation2]
        %v1570 = vld [vmem:[%s1569] ss:$2 sm:$0xff]
        %s1571 = scalar_lea.vmem %s1436, 392 [#allocation2]
        %v1572 = vld [vmem:[%s1571] ss:$2 sm:$0xff]
        %s1573 = scalar_lea.vmem %s1436, 456 [#allocation2]
        %v1574 = vld [vmem:[%s1573] ss:$2 sm:$0xff]
        %v1575 = vpack.c.bf16 %v1562, %v1560
        %v1576 = vpack.c.bf16 %v1566, %v1564
        %v1577 = vpack.c.bf16 %v1570, %v1568
        %v1578 = vpack.c.bf16 %v1574, %v1572
        %s1579 = scalar_lea.vmem [#allocation8], 448
        %v1580 = vld [vmem:[%s1579] sm:$0xf]
        %v1581 = vld [vmem:[%s1579 + $0x4] sm:$0xf]
        %v1582 = vld [vmem:[%s1579 + $0x8] sm:$0xf]
        %v1583 = vld [vmem:[%s1579 + $0xc] sm:$0xf]
        %v1584 = vld [vmem:[%s1579 + $0x10] sm:$0xf]
        %v1585 = vld [vmem:[%s1579 + $0x14] sm:$0xf]
        %v1586 = vld [vmem:[%s1579 + $0x18] sm:$0xf]
        %v1587 = vld [vmem:[%s1579 + $0x1c] sm:$0xf]
        %v1588 = vld [vmem:[%s1579 + $0x20] sm:$0xf]
        %v1589 = vld [vmem:[%s1579 + $0x24] sm:$0xf]
        %v1590 = vld [vmem:[%s1579 + $0x28] sm:$0xf]
        %v1591 = vld [vmem:[%s1579 + $0x2c] sm:$0xf]
        %v1592 = vld [vmem:[%s1579 + $0x30] sm:$0xf]
        %v1593 = vld [vmem:[%s1579 + $0x34] sm:$0xf]
        %v1594 = vld [vmem:[%s1579 + $0x38] sm:$0xf]
        %v1595 = vld [vmem:[%s1579 + $0x3c] sm:$0xf]
        %v1612 = vunpack.c.l.b16 %v1580
        %v1613 = vunpack.c.l.b16 %v1581
        %v1614 = vunpack.c.l.b16 %v1582
        %v1615 = vunpack.c.l.b16 %v1583
        %v1616 = vunpack.c.l.b16 %v1584
        %v1617 = vunpack.c.l.b16 %v1585
        %v1618 = vunpack.c.l.b16 %v1586
        %v1619 = vunpack.c.l.b16 %v1587
        %v1620 = vunpack.c.l.b16 %v1588
        %v1621 = vunpack.c.l.b16 %v1589
        %v1622 = vunpack.c.l.b16 %v1590
        %v1623 = vunpack.c.l.b16 %v1591
        %v1624 = vunpack.c.l.b16 %v1592
        %v1625 = vunpack.c.l.b16 %v1593
        %v1626 = vunpack.c.l.b16 %v1594
        %v1627 = vunpack.c.l.b16 %v1595
        %v1628 = vpack.c.b16 %v1613, %v1612
        %v1629 = vpack.c.b16 %v1615, %v1614
        %v1630 = vpack.c.b16 %v1617, %v1616
        %v1631 = vpack.c.b16 %v1619, %v1618
        %v1632 = vpack.c.b16 %v1621, %v1620
        %v1633 = vpack.c.b16 %v1623, %v1622
        %v1634 = vpack.c.b16 %v1625, %v1624
        %v1635 = vpack.c.b16 %v1627, %v1626
        %1644 = vmatpush.bf16.msra.mxu0 %v1635
        %1645 = vmatpush.bf16.msra.mxu0 %v1634
        %1646 = vmatpush.bf16.msra.mxu0 %v1633
        %1647 = vmatpush.bf16.msra.mxu0 %v1632
        %1648 = vmatpush.bf16.msra.mxu0 %v1631
        %1649 = vmatpush.bf16.msra.mxu0 %v1630
        %1650 = vmatpush.bf16.msra.mxu0 %v1629
        %1651 = vmatpush.bf16.msra.mxu0 %v1628
        %1652 = vmatmul.bf16.gmra.mxu0 %v1575
        %v1653 = vpop.f32.mrf.mxu0
        %v1654 = vadd.f32 0.0, %v1653
        %v1655 = vpop.f32.mrf.mxu0
        %v1656 = vadd.f32 0.0, %v1655
        %1657 = vmatmul.bf16.gmra.mxu0 %v1576
        %v1658 = vpop.f32.mrf.mxu0
        %v1659 = vadd.f32 0.0, %v1658
        %v1660 = vpop.f32.mrf.mxu0
        %v1661 = vadd.f32 0.0, %v1660
        %1662 = vmatmul.bf16.gmra.mxu0 %v1577
        %v1663 = vpop.f32.mrf.mxu0
        %v1664 = vadd.f32 0.0, %v1663
        %v1665 = vpop.f32.mrf.mxu0
        %v1666 = vadd.f32 0.0, %v1665
        %1667 = vmatmul.bf16.gmra.mxu0 %v1578
        %v1668 = vpop.f32.mrf.mxu0
        %v1669 = vadd.f32 0.0, %v1668
        %v1670 = vpop.f32.mrf.mxu0
        %v1671 = vadd.f32 0.0, %v1670
        %1672 = vdwg.mxu0
        %v1673 = vadd.f32 %v1551, %v1654
        %v1674 = vadd.f32 %v1552, %v1656
        %v1675 = vadd.f32 %v1553, %v1659
        %v1676 = vadd.f32 %v1554, %v1661
        %v1677 = vadd.f32 %v1555, %v1664
        %v1678 = vadd.f32 %v1556, %v1666
        %v1679 = vadd.f32 %v1557, %v1669
        %v1680 = vadd.f32 %v1558, %v1671
        %s1681 = scalar_lea.vmem %s1436, 9 [#allocation2]
        %v1682 = vld [vmem:[%s1681] ss:$2 sm:$0xff]
        %s1683 = scalar_lea.vmem %s1436, 73 [#allocation2]
        %v1684 = vld [vmem:[%s1683] ss:$2 sm:$0xff]
        %s1685 = scalar_lea.vmem %s1436, 137 [#allocation2]
        %v1686 = vld [vmem:[%s1685] ss:$2 sm:$0xff]
        %s1687 = scalar_lea.vmem %s1436, 201 [#allocation2]
        %v1688 = vld [vmem:[%s1687] ss:$2 sm:$0xff]
        %s1689 = scalar_lea.vmem %s1436, 265 [#allocation2]
        %v1690 = vld [vmem:[%s1689] ss:$2 sm:$0xff]
        %s1691 = scalar_lea.vmem %s1436, 329 [#allocation2]
        %v1692 = vld [vmem:[%s1691] ss:$2 sm:$0xff]
        %s1693 = scalar_lea.vmem %s1436, 393 [#allocation2]
        %v1694 = vld [vmem:[%s1693] ss:$2 sm:$0xff]
        %s1695 = scalar_lea.vmem %s1436, 457 [#allocation2]
        %v1696 = vld [vmem:[%s1695] ss:$2 sm:$0xff]
        %v1697 = vpack.c.bf16 %v1684, %v1682
        %v1698 = vpack.c.bf16 %v1688, %v1686
        %v1699 = vpack.c.bf16 %v1692, %v1690
        %v1700 = vpack.c.bf16 %v1696, %v1694
        %s1701 = scalar_lea.vmem [#allocation8], 512
        %v1702 = vld [vmem:[%s1701] sm:$0xf]
        %v1703 = vld [vmem:[%s1701 + $0x4] sm:$0xf]
        %v1704 = vld [vmem:[%s1701 + $0x8] sm:$0xf]
        %v1705 = vld [vmem:[%s1701 + $0xc] sm:$0xf]
        %v1706 = vld [vmem:[%s1701 + $0x10] sm:$0xf]
        %v1707 = vld [vmem:[%s1701 + $0x14] sm:$0xf]
        %v1708 = vld [vmem:[%s1701 + $0x18] sm:$0xf]
        %v1709 = vld [vmem:[%s1701 + $0x1c] sm:$0xf]
        %v1710 = vld [vmem:[%s1701 + $0x20] sm:$0xf]
        %v1711 = vld [vmem:[%s1701 + $0x24] sm:$0xf]
        %v1712 = vld [vmem:[%s1701 + $0x28] sm:$0xf]
        %v1713 = vld [vmem:[%s1701 + $0x2c] sm:$0xf]
        %v1714 = vld [vmem:[%s1701 + $0x30] sm:$0xf]
        %v1715 = vld [vmem:[%s1701 + $0x34] sm:$0xf]
        %v1716 = vld [vmem:[%s1701 + $0x38] sm:$0xf]
        %v1717 = vld [vmem:[%s1701 + $0x3c] sm:$0xf]
        %v1734 = vunpack.c.l.b16 %v1702
        %v1735 = vunpack.c.l.b16 %v1703
        %v1736 = vunpack.c.l.b16 %v1704
        %v1737 = vunpack.c.l.b16 %v1705
        %v1738 = vunpack.c.l.b16 %v1706
        %v1739 = vunpack.c.l.b16 %v1707
        %v1740 = vunpack.c.l.b16 %v1708
        %v1741 = vunpack.c.l.b16 %v1709
        %v1742 = vunpack.c.l.b16 %v1710
        %v1743 = vunpack.c.l.b16 %v1711
        %v1744 = vunpack.c.l.b16 %v1712
        %v1745 = vunpack.c.l.b16 %v1713
        %v1746 = vunpack.c.l.b16 %v1714
        %v1747 = vunpack.c.l.b16 %v1715
        %v1748 = vunpack.c.l.b16 %v1716
        %v1749 = vunpack.c.l.b16 %v1717
        %v1750 = vpack.c.b16 %v1735, %v1734
        %v1751 = vpack.c.b16 %v1737, %v1736
        %v1752 = vpack.c.b16 %v1739, %v1738
        %v1753 = vpack.c.b16 %v1741, %v1740
        %v1754 = vpack.c.b16 %v1743, %v1742
        %v1755 = vpack.c.b16 %v1745, %v1744
        %v1756 = vpack.c.b16 %v1747, %v1746
        %v1757 = vpack.c.b16 %v1749, %v1748
        %1766 = vmatpush.bf16.msra.mxu0 %v1757
        %1767 = vmatpush.bf16.msra.mxu0 %v1756
        %1768 = vmatpush.bf16.msra.mxu0 %v1755
        %1769 = vmatpush.bf16.msra.mxu0 %v1754
        %1770 = vmatpush.bf16.msra.mxu0 %v1753
        %1771 = vmatpush.bf16.msra.mxu0 %v1752
        %1772 = vmatpush.bf16.msra.mxu0 %v1751
        %1773 = vmatpush.bf16.msra.mxu0 %v1750
        %1774 = vmatmul.bf16.gmra.mxu0 %v1697
        %v1775 = vpop.f32.mrf.mxu0
        %v1776 = vadd.f32 0.0, %v1775
        %v1777 = vpop.f32.mrf.mxu0
        %v1778 = vadd.f32 0.0, %v1777
        %1779 = vmatmul.bf16.gmra.mxu0 %v1698
        %v1780 = vpop.f32.mrf.mxu0
        %v1781 = vadd.f32 0.0, %v1780
        %v1782 = vpop.f32.mrf.mxu0
        %v1783 = vadd.f32 0.0, %v1782
        %1784 = vmatmul.bf16.gmra.mxu0 %v1699
        %v1785 = vpop.f32.mrf.mxu0
        %v1786 = vadd.f32 0.0, %v1785
        %v1787 = vpop.f32.mrf.mxu0
        %v1788 = vadd.f32 0.0, %v1787
        %1789 = vmatmul.bf16.gmra.mxu0 %v1700
        %v1790 = vpop.f32.mrf.mxu0
        %v1791 = vadd.f32 0.0, %v1790
        %v1792 = vpop.f32.mrf.mxu0
        %v1793 = vadd.f32 0.0, %v1792
        %1794 = vdwg.mxu0
        %v1795 = vadd.f32 %v1673, %v1776
        %v1796 = vadd.f32 %v1674, %v1778
        %v1797 = vadd.f32 %v1675, %v1781
        %v1798 = vadd.f32 %v1676, %v1783
        %v1799 = vadd.f32 %v1677, %v1786
        %v1800 = vadd.f32 %v1678, %v1788
        %v1801 = vadd.f32 %v1679, %v1791
        %v1802 = vadd.f32 %v1680, %v1793
        %v1803 = vld [vmem:[%s453] sm:$0x1]
        %v1805 = vperm.slane %v1803, 0
        %v1807 = vmul.f32 %v1795, %v1805
        %v1808 = vmul.f32 %v1796, %v1805
        %v1809 = vmul.f32 %v1797, %v1805
        %v1810 = vmul.f32 %v1798, %v1805
        %v1811 = vmul.f32 %v1799, %v1805
        %v1812 = vmul.f32 %v1800, %v1805
        %v1813 = vmul.f32 %v1801, %v1805
        %v1814 = vmul.f32 %v1802, %v1805
        %v1815 = vld [vmem:[%s456] sm:$0x1]
        %v1817 = vperm.slane %v1815, 0
        %v1819 = vadd.f32 %v1807, %v1817
        %v1820 = vadd.f32 %v1808, %v1817
        %v1821 = vadd.f32 %v1809, %v1817
        %v1822 = vadd.f32 %v1810, %v1817
        %v1823 = vadd.f32 %v1811, %v1817
        %v1824 = vadd.f32 %v1812, %v1817
        %v1825 = vadd.f32 %v1813, %v1817
        %v1826 = vadd.f32 %v1814, %v1817
        %v1827 = vmax.f32 %v1819, 0.0
        %v1828 = vmax.f32 %v1820, 0.0
        %v1829 = vmax.f32 %v1821, 0.0
        %v1830 = vmax.f32 %v1822, 0.0
        %v1831 = vmax.f32 %v1823, 0.0
        %v1832 = vmax.f32 %v1824, 0.0
        %v1833 = vmax.f32 %v1825, 0.0
        %v1834 = vmax.f32 %v1826, 0.0
        %v1835 = vpack.c.bf16 %v1827, %v1827
        %v1836 = vpack.c.bf16 %v1828, %v1828
        %v1837 = vpack.c.bf16 %v1829, %v1829
        %v1838 = vpack.c.bf16 %v1830, %v1830
        %v1839 = vpack.c.bf16 %v1831, %v1831
        %v1840 = vpack.c.bf16 %v1832, %v1832
        %v1841 = vpack.c.bf16 %v1833, %v1833
        %v1842 = vpack.c.bf16 %v1834, %v1834
        %1843 = vst [vmem:[%s438] sm:$0xf] %v1835
        %1844 = vst [vmem:[%s438 + $0x4] sm:$0xf] %v1836
        %1845 = vst [vmem:[%s438 + $0x8] sm:$0xf] %v1837
        %1846 = vst [vmem:[%s438 + $0xc] sm:$0xf] %v1838
        %1847 = vst [vmem:[%s438 + $0x10] sm:$0xf] %v1839
        %1848 = vst [vmem:[%s438 + $0x14] sm:$0xf] %v1840
        %1849 = vst [vmem:[%s438 + $0x18] sm:$0xf] %v1841
        %1850 = vst [vmem:[%s438 + $0x1c] sm:$0xf] %v1842
        %v1851 = vld [vmem:[%s444] sm:$0x1]
        %v1852 = vadd.f32 %v1827, %v1828
        %v1853 = vadd.f32 %v1852, %v1829
        %v1854 = vadd.f32 %v1853, %v1830
        %v1855 = vadd.f32 %v1854, %v1831
        %v1856 = vadd.f32 %v1855, %v1832
        %v1857 = vadd.f32 %v1856, %v1833
        %v1858 = vadd.f32 %v1857, %v1834
        %v1859 = vrot.slane %v1858, 4
        %v1860 = vadd.f32 %v1858, %v1859
        %v1861 = vrot.slane %v1860, 2
        %v1862 = vadd.f32 %v1860, %v1861
        %v1863 = vrot.slane %v1862, 1
        %v1864 = vadd.f32 %v1862, %v1863
        %v1865 = vadd.f32 %v1851, %v1864
        %1866 = vst [vmem:[%s444] sm:$0x1] %v1865
        %s1867 = sand.u32 %s234, 1
        %s1868 = scalar_lea.sflag [#allocation5], %s1867
        %s1869 = sand.u32 %s234, 1
        %s1870 = smul.addr %s1869, 32
        %s1871 = scalar_lea.vmem [#allocation9], %s1870
        %s1872 = sand.u32 %s262, 1
        %s1873 = scalar_lea.sflag [#allocation11], %s1872
        %s1874 = sand.u32 %s262, 1
        %s1875 = scalar_lea.vmem [#allocation10], %s1874
        // Predicated region
        $region68: #{tpu_custom_call.1} parent=47 // pred_check
          %p1876 = pneg %p244
        $region69: #{tpu_custom_call.1} parent=47 // pred_check_branch
          %1878 = sbr.rel (%p1876) target = $region71
        $region70: #{tpu_custom_call.1} parent=47 // pred_region
          %1880 = vsyncadd %s1868, 0
          %s1881 = smul.addr %s34, 8
          %s1882 = sadd.s32 %s35, %s1881
          %s1883 = smul.addr %s1882, 4
          %s1884 = scalar_lea.hbm %s7, %s1883
          %s1885 = sshll.u32 %s1871, 4
          %s1886 = int_to_ptr.vmem [resolvable:$true] %s1885
          %s1887 = sshll.u32 %s1884, 4
          %s1888 = int_to_ptr.hbm [resolvable:$true] %s1887
          %1893 = dma.vmem_to_hbm [thread:$0]  %s1886, 512, %s1888, %s1868, 64, 64, 4
        $region71: #{tpu_custom_call.1} parent=47 // pred_fallthru
          _
        // Predicated region
        $region72: #{tpu_custom_call.1} parent=47 // pred_check
          %p1894 = pneg %p272
        $region73: #{tpu_custom_call.1} parent=47 // pred_check_branch
          %1896 = sbr.rel (%p1894) target = $region75
        $region74: #{tpu_custom_call.1} parent=47 // pred_region
          %1898 = vsyncadd %s1873, 0
          %s1899 = sadd.s32 %s35, %s34
          %s1900 = scalar_lea.hbm %s8, %s1899
          %s1902 = sshll.u32 %s1875, 4
          %s1903 = int_to_ptr.vmem [resolvable:$true] %s1902
          %s1904 = sshll.u32 %s1900, 4
          %s1905 = int_to_ptr.hbm [resolvable:$true] %s1904
          %1907 = dma.vmem_to_hbm [thread:$0]  %s1903, 16, %s1905, %s1873
        $region75: #{tpu_custom_call.1} parent=47 // pred_fallthru
          _
      $region48: #{tpu_custom_call.1} parent=5 // pred_fallthru
        _
      %p1908 = scmp.le.s32.totalorder 2, %s25
      // Predicated region
      $region76: #{tpu_custom_call.1} parent=5 // pred_check
        %p1909 = pneg %p1908
      $region77: #{tpu_custom_call.1} parent=5 // pred_check_branch
        %1911 = sbr.rel (%p1909) target = $region79
      $region78: #{tpu_custom_call.1} parent=5 // pred_region
        %s1912 = ssub.s32 %s25, 2
        // Predicated region
        $region80: #{tpu_custom_call.1} parent=78 // pred_check
          %p1913 = pneg %p250
        $region81: #{tpu_custom_call.1} parent=78 // pred_check_branch
          %1915 = sbr.rel (%p1913) target = $region83
        $region82: #{tpu_custom_call.1} parent=78 // pred_region
          %s1916 = sand.u32 %s235, 1
          %s1917 = scalar_lea.sflag [#allocation5], %s1916
          %s1918 = sand.u32 %s235, 1
          %s1919 = smul.addr %s1918, 32
          %s1920 = scalar_lea.vmem [#allocation9], %s1919
          %1922 = dma.done %s1917, 512
        $region83: #{tpu_custom_call.1} parent=78 // pred_fallthru
          _
        // Predicated region
        $region84: #{tpu_custom_call.1} parent=78 // pred_check
          %p1923 = pneg %p278
        $region85: #{tpu_custom_call.1} parent=78 // pred_check_branch
          %1925 = sbr.rel (%p1923) target = $region87
        $region86: #{tpu_custom_call.1} parent=78 // pred_region
          %s1926 = sand.u32 %s263, 1
          %s1927 = scalar_lea.sflag [#allocation11], %s1926
          %s1928 = sand.u32 %s263, 1
          %s1929 = scalar_lea.vmem [#allocation10], %s1928
          %1931 = dma.done %s1927, 16
        $region87: #{tpu_custom_call.1} parent=78 // pred_fallthru
          _
      $region79: #{tpu_custom_call.1} parent=5 // pred_fallthru
        _
    $region6: #{tpu_custom_call.1} parent=1 // loop_footer
      %s29 = sadd.s32 1, %s25
    $region7: #{tpu_custom_call.1} parent=1 // loop_footer_branch
      %24 = sbr.rel target = $region3
    $region8: #{tpu_custom_call.1} parent=1 // loop_exit
      _
    %1932 = vsyncpa [#allocation4], 1
    %s1933 = scalar_lea.sflag [#allocation4], 1
    %1934 = vsyncpa %s1933, 1
    %1935 = vsyncpa [#allocation7], 1
    %1936 = vsyncpa [#allocation5], 1
    %s1937 = scalar_lea.sflag [#allocation5], 1
    %1938 = vsyncpa %s1937, 1
    %1939 = vsyncpa [#allocation11], 1
    %s1940 = scalar_lea.sflag [#allocation11], 1
    %1941 = vsyncpa %s1940, 1

</llo_original>
